<compile_context>
chip_gen: v7x
topology: tpu7x:2x2x1
jax: 0.10.0
libtpu: 0.0.40
codegen_flags: <defaults>
</compile_context>

<pallas_src>
import numpy as np

import jax
import jax.numpy as jnp
from jax import lax
from jax.experimental import pallas as pl
from jax.experimental.pallas import tpu as pltpu

LANES = 128
VMEM_LIMIT = 32 * 1024 * 1024


# ------------------------------------------------------------------
# fused kernel: conv1+pool -> conv2+pool -> fc1 -> fc2 -> fc3
# ------------------------------------------------------------------

def _danknet_kernel(x_ref, w1_ref, b1_ref, w2_ref, b2_ref,
                    wf1_ref, bf1_ref, wf2_ref, bf2_ref, wf3_ref, bf3_ref,
                    o_ref):
    B = o_ref.shape[0]          # images per grid step
    R = 32 * B                  # 32 flat rows per image
    xs = x_ref[...]             # (R + 32, 128) bf16 ; lane = w*4 + c

    # ---- conv1: one banded matmul, K = 5 kernel rows x 128 ----------------
    M1 = R + 24
    patch1 = jnp.concatenate([xs[i:i + M1, :] for i in range(5)], axis=1)   # (M1, 640)
    z1 = jnp.dot(patch1, w1_ref[...], preferred_element_type=jnp.float32)   # (M1, 256)
    # horizontal 2-pool: even/odd output columns live in the two 128-lane halves
    a1 = jnp.maximum(jnp.maximum(z1[:, :LANES], z1[:, LANES:]) + b1_ref[...], 0.0)
    # vertical 2-pool: adjacent rows; valid pooled rows land at even row offsets
    M2 = R + 16
    p1 = jnp.maximum(a1[0:M2, :], a1[1:M2 + 1, :]).astype(jnp.bfloat16)     # (M2, 128)

    # ---- conv2: same trick; pooled1 rows sit at stride-2 row offsets -------
    M3 = R + 8
    patch2 = jnp.concatenate([p1[2 * i:2 * i + M3, :] for i in range(5)],
                             axis=1)                                        # (M3, 640)
    z2 = jnp.dot(patch2, w2_ref[...], preferred_element_type=jnp.float32)   # (M3, 256)
    a2 = jnp.maximum(jnp.maximum(z2[:, :LANES], z2[:, LANES:]) + b2_ref[...], 0.0)
    p2 = jnp.maximum(a2[0:R, :], a2[2:R + 2, :])                            # (R, 128)

    # ---- gather the 5 valid pooled rows per image -> fc features ----------
    # pooled2[b, ph, pw, oc] lives at p2[b*32 + 4*ph, pw*16 + oc]
    p2r = p2.reshape(B, 32, LANES)
    feat = jnp.concatenate([p2r[:, 4 * ph, :] for ph in range(5)], axis=1)  # (B, 640)
    feat = feat.astype(jnp.bfloat16)
    if B < 8:                                   # keep the MXU M dimension >= 8
        feat = jnp.concatenate(
            [feat, jnp.zeros((8 - B, feat.shape[1]), feat.dtype)], axis=0)

    # ---- fc1 -> ReLU -> fc2 -> ReLU -> fc3 ---------------------------------
    h = jnp.dot(feat, wf1_ref[...], preferred_element_type=jnp.float32)
    h = jnp.maximum(h + bf1_ref[...], 0.0).astype(jnp.bfloat16)
    h = jnp.dot(h, wf2_ref[...], preferred_element_type=jnp.float32)
    h = jnp.maximum(h + bf2_ref[...], 0.0).astype(jnp.bfloat16)
    logits = (jnp.dot(h, wf3_ref[...], preferred_element_type=jnp.float32)
              + bf3_ref[...])
    o_ref[...] = logits[:B, :]


# ------------------------------------------------------------------
# one-time parameter repacking (banded conv weights, fc packing)
# ------------------------------------------------------------------

def prepare_params(params):
    w1 = np.asarray(params["conv1_w"])   # (6, 3, 5, 5)   (oc, c, kh, kw)
    b1 = np.asarray(params["conv1_b"])
    w2 = np.asarray(params["conv2_w"])   # (16, 6, 5, 5)
    b2 = np.asarray(params["conv2_b"])

    # conv1 banded weight: row k = i*128 + w*4 + c ; col n = (ow%2)*128 + (ow//2)*8 + oc
    W1p = np.zeros((5 * 128, 256), np.float32)
    for i in range(5):
        for j in range(5):
            for ow in range(28):
                w = ow + j
                W1p[i * 128 + w * 4: i * 128 + w * 4 + 3,
                    (ow % 2) * 128 + (ow // 2) * 8:
                    (ow % 2) * 128 + (ow // 2) * 8 + 6] = w1[:, :, i, j].T
    b1row = np.zeros((1, 128), np.float32)
    for pw in range(14):
        b1row[0, pw * 8: pw * 8 + 6] = b1

    # conv2 banded weight: row k = i*128 + pw*8 + c ; col n = (ow%2)*128 + (ow//2)*16 + oc
    W2p = np.zeros((5 * 128, 256), np.float32)
    for i in range(5):
        for j in range(5):
            for ow in range(10):
                pw = ow + j
                W2p[i * 128 + pw * 8: i * 128 + pw * 8 + 6,
                    (ow % 2) * 128 + (ow // 2) * 16:
                    (ow % 2) * 128 + (ow // 2) * 16 + 16] = w2[:, :, i, j].T
    b2row = np.zeros((1, 128), np.float32)
    for pw2 in range(5):
        b2row[0, pw2 * 16: pw2 * 16 + 16] = b2

    # fc1: absorb PyTorch's (C,H,W) flatten order and the kernel's packed
    # feature layout (k = ph*128 + pw*16 + oc) into the weight.  K = 640.
    fc1_w = np.asarray(params["fc1_w"])   # (400, 120)
    Wf1 = np.zeros((640, 128), np.float32)
    for oc in range(16):
        for ph in range(5):
            for pw in range(5):
                Wf1[ph * 128 + pw * 16 + oc, :120] = fc1_w[oc * 25 + ph * 5 + pw]
    bf1 = np.zeros((1, 128), np.float32); bf1[0, :120] = np.asarray(params["fc1_b"])
    Wf2 = np.zeros((128, 128), np.float32); Wf2[:120, :84] = np.asarray(params["fc2_w"])
    bf2 = np.zeros((1, 128), np.float32); bf2[0, :84] = np.asarray(params["fc2_b"])
    Wf3 = np.zeros((128, 128), np.float32); Wf3[:84, :10] = np.asarray(params["fc3_w"])
    bf3 = np.zeros((1, 128), np.float32); bf3[0, :10] = np.asarray(params["fc3_b"])

    bf = lambda a: jnp.asarray(a, jnp.bfloat16)
    f32 = lambda a: jnp.asarray(a, jnp.float32)
    return {"w1": bf(W1p), "b1": f32(b1row), "w2": bf(W2p), "b2": f32(b2row),
            "wf1": bf(Wf1), "bf1": f32(bf1), "wf2": bf(Wf2), "bf2": f32(bf2),
            "wf3": bf(Wf3), "bf3": f32(bf3)}


# ------------------------------------------------------------------
# DankNet forward
# ------------------------------------------------------------------

def danknet_forward(prep, x_nchw, b_tile=8):
    n = x_nchw.shape[0]
    # batch-block, keeping >= 2 grid steps so v7x's two TensorCores both work
    bt = 1 if n < 2 else max(1, min(b_tile, n // 2))
    n_tiles = -(-n // bt)
    n_pad = n_tiles * bt

    # NCHW -> NHWC, pad C 3->4, flatten each image row to 128 lanes (w*4 + c),
    # cast bf16, group bt images per slab and append 32 zero rows per slab.
    x = jnp.transpose(x_nchw, (0, 2, 3, 1)).astype(jnp.float32)      # (N,32,32,3)
    x = jnp.pad(x, ((0, n_pad - n), (0, 0), (0, 0), (0, 1)))         # (np,32,32,4)
    x = x.reshape(n_pad, 32, LANES).astype(jnp.bfloat16)
    x = x.reshape(n_tiles, bt * 32, LANES)
    x = jnp.pad(x, ((0, 0), (0, 32), (0, 0)))                        # (T, bt*32+32, 128)
    rows = bt * 32 + 32

    in_specs = [
        pl.BlockSpec((None, rows, LANES), lambda t: (t, 0, 0)),
        pl.BlockSpec(prep["w1"].shape, lambda t: (0, 0)),
        pl.BlockSpec(prep["b1"].shape, lambda t: (0, 0)),
        pl.BlockSpec(prep["w2"].shape, lambda t: (0, 0)),
        pl.BlockSpec(prep["b2"].shape, lambda t: (0, 0)),
        pl.BlockSpec(prep["wf1"].shape, lambda t: (0, 0)),
        pl.BlockSpec(prep["bf1"].shape, lambda t: (0, 0)),
        pl.BlockSpec(prep["wf2"].shape, lambda t: (0, 0)),
        pl.BlockSpec(prep["bf2"].shape, lambda t: (0, 0)),
        pl.BlockSpec(prep["wf3"].shape, lambda t: (0, 0)),
        pl.BlockSpec(prep["bf3"].shape, lambda t: (0, 0)),
    ]
    out = pl.pallas_call(
        _danknet_kernel,
        grid=(n_tiles,),
        in_specs=in_specs,
        out_specs=pl.BlockSpec((None, bt, LANES), lambda t: (t, 0, 0)),
        out_shape=jax.ShapeDtypeStruct((n_tiles, bt, LANES), jnp.float32),
        compiler_params=pltpu.CompilerParams(
            dimension_semantics=("parallel",),
            vmem_limit_bytes=VMEM_LIMIT),
    )(x, prep["w1"], prep["b1"], prep["w2"], prep["b2"],
      prep["wf1"], prep["bf1"], prep["wf2"], prep["bf2"],
      prep["wf3"], prep["bf3"])
    return out.reshape(n_pad, LANES)[:n, :10]


# ------------------------------------------------------------------
# pure-JAX reference (PyTorch semantics) + deterministic init
# ------------------------------------------------------------------

def danknet_reference(params, x_nchw):
    x = jnp.transpose(x_nchw, (0, 2, 3, 1)).astype(jnp.float32)
    w1 = jnp.transpose(params["conv1_w"], (2, 3, 1, 0))
    y = lax.conv_general_dilated(x, w1, (1, 1), "VALID",
                                 dimension_numbers=("NHWC", "HWIO", "NHWC"))
    y = jax.nn.relu(y + params["conv1_b"])
    y = lax.reduce_window(y, -jnp.inf, lax.max, (1, 2, 2, 1), (1, 2, 2, 1), "VALID")
    w2 = jnp.transpose(params["conv2_w"], (2, 3, 1, 0))
    y = lax.conv_general_dilated(y, w2, (1, 1), "VALID",
                                 dimension_numbers=("NHWC", "HWIO", "NHWC"))
    y = jax.nn.relu(y + params["conv2_b"])
    y = lax.reduce_window(y, -jnp.inf, lax.max, (1, 2, 2, 1), (1, 2, 2, 1), "VALID")
    feat = jnp.transpose(y, (0, 3, 1, 2)).reshape(x.shape[0], -1)   # (C,H,W) flatten
    h = jax.nn.relu(feat @ params["fc1_w"] + params["fc1_b"])
    h = jax.nn.relu(h @ params["fc2_w"] + params["fc2_b"])
    return h @ params["fc3_w"] + params["fc3_b"]


def init_params(key):
    """Deterministic PyTorch-style uniform(-1/sqrt(fan_in), 1/sqrt(fan_in))."""
    keys = jax.random.split(key, 10)

    def u(k, shape, fan_in):
        bound = 1.0 / (fan_in ** 0.5)
        return jax.random.uniform(k, shape, jnp.float32, -bound, bound)

    return {
        "conv1_w": u(keys[0], (6, 3, 5, 5), 3 * 5 * 5),
        "conv1_b": u(keys[1], (6,), 3 * 5 * 5),
        "conv2_w": u(keys[2], (16, 6, 5, 5), 6 * 5 * 5),
        "conv2_b": u(keys[3], (16,), 6 * 5 * 5),
        "fc1_w":   u(keys[4], (16 * 5 * 5, 120), 16 * 5 * 5),   # (in, out)
        "fc1_b":   u(keys[5], (120,), 16 * 5 * 5),
        "fc2_w":   u(keys[6], (120, 84), 120),
        "fc2_b":   u(keys[7], (84,), 120),
        "fc3_w":   u(keys[8], (84, 10), 84),
        "fc3_b":   u(keys[9], (10,), 84),
    }


if __name__ == "__main__":
    key = jax.random.PRNGKey(0)
    pkey, xkey = jax.random.split(key)
    params = init_params(pkey)
    prep = prepare_params(params)          # one-time weight repack / banding
    # 32x32x3 input is required so the flatten matches 16*5*5.
    x = jax.random.normal(xkey, (2, 3, 32, 32), dtype=jnp.float32)

    fwd = jax.jit(danknet_forward)
    out = jax.block_until_ready(fwd(prep, x))

    assert out.shape == (2, 10), out.shape
    assert out.dtype == jnp.float32

    ref = danknet_reference(params, x)
    err = float(jnp.max(jnp.abs(out - ref)))
    assert err < 5e-2, f"max |pallas - reference| = {err}"
    print("KERNEL_OK")
</pallas_src>

<mosaic_0001>
module attributes {stable_mosaic.version = 11 : i64} {
  func.func @_danknet_kernel(%arg0: i32, %arg1: memref<1x64x128xbf16, #tpu.memory_space<vmem>>, %arg2: memref<640x256xbf16, #tpu.memory_space<vmem>>, %arg3: memref<1x128xf32, #tpu.memory_space<vmem>>, %arg4: memref<640x256xbf16, #tpu.memory_space<vmem>>, %arg5: memref<1x128xf32, #tpu.memory_space<vmem>>, %arg6: memref<640x128xbf16, #tpu.memory_space<vmem>>, %arg7: memref<1x128xf32, #tpu.memory_space<vmem>>, %arg8: memref<128x128xbf16, #tpu.memory_space<vmem>>, %arg9: memref<1x128xf32, #tpu.memory_space<vmem>>, %arg10: memref<128x128xbf16, #tpu.memory_space<vmem>>, %arg11: memref<1x128xf32, #tpu.memory_space<vmem>>, %arg12: memref<1x1x128xf32, #tpu.memory_space<vmem>>) attributes {dimension_semantics = [#tpu.dimension_semantics<parallel>], iteration_bounds = array<i64: 2>, scalar_prefetch = 0 : i64, scratch_operands = 0 : i64, tpu.core_type = #tpu.core_type<tc>, window_params = [{transform_indices = @transform_0, window_bounds = array<i64: 1, 64, 128>}, {pipeline_mode = #tpu.pipeline_mode<synchronous>, transform_indices = @transform_1, window_bounds = array<i64: 640, 256>}, {pipeline_mode = #tpu.pipeline_mode<synchronous>, transform_indices = @transform_2, window_bounds = array<i64: 1, 128>}, {pipeline_mode = #tpu.pipeline_mode<synchronous>, transform_indices = @transform_3, window_bounds = array<i64: 640, 256>}, {pipeline_mode = #tpu.pipeline_mode<synchronous>, transform_indices = @transform_4, window_bounds = array<i64: 1, 128>}, {pipeline_mode = #tpu.pipeline_mode<synchronous>, transform_indices = @transform_5, window_bounds = array<i64: 640, 128>}, {pipeline_mode = #tpu.pipeline_mode<synchronous>, transform_indices = @transform_6, window_bounds = array<i64: 1, 128>}, {pipeline_mode = #tpu.pipeline_mode<synchronous>, transform_indices = @transform_7, window_bounds = array<i64: 128, 128>}, {pipeline_mode = #tpu.pipeline_mode<synchronous>, transform_indices = @transform_8, window_bounds = array<i64: 1, 128>}, {pipeline_mode = #tpu.pipeline_mode<synchronous>, transform_indices = @transform_9, window_bounds = array<i64: 128, 128>}, {pipeline_mode = #tpu.pipeline_mode<synchronous>, transform_indices = @transform_10, window_bounds = array<i64: 1, 128>}, {transform_indices = @transform_11, window_bounds = array<i64: 1, 1, 128>}]} {
    %c0 = arith.constant 0 : index
    %c0_0 = arith.constant 0 : index
    %c0_1 = arith.constant 0 : index
    %0 = vector.load %arg1[%c0, %c0_0, %c0_1] : memref<1x64x128xbf16, #tpu.memory_space<vmem>>, vector<1x64x128xbf16>
    %1 = vector.shape_cast %0 : vector<1x64x128xbf16> to vector<64x128xbf16>
    %2 = vector.extract_strided_slice %1 {offsets = [0, 0], sizes = [56, 128], strides = [1, 1]} : vector<64x128xbf16> to vector<56x128xbf16>
    %3 = vector.extract_strided_slice %1 {offsets = [1, 0], sizes = [56, 128], strides = [1, 1]} : vector<64x128xbf16> to vector<56x128xbf16>
    %4 = vector.extract_strided_slice %1 {offsets = [2, 0], sizes = [56, 128], strides = [1, 1]} : vector<64x128xbf16> to vector<56x128xbf16>
    %5 = vector.extract_strided_slice %1 {offsets = [3, 0], sizes = [56, 128], strides = [1, 1]} : vector<64x128xbf16> to vector<56x128xbf16>
    %6 = vector.extract_strided_slice %1 {offsets = [4, 0], sizes = [56, 128], strides = [1, 1]} : vector<64x128xbf16> to vector<56x128xbf16>
    %7 = tpu.concatenate %2, %3, %4, %5, %6 in 1 : vector<56x128xbf16>, vector<56x128xbf16>, vector<56x128xbf16>, vector<56x128xbf16>, vector<56x128xbf16> -> vector<56x640xbf16>
    %c0_2 = arith.constant 0 : index
    %c0_3 = arith.constant 0 : index
    %8 = vector.load %arg2[%c0_2, %c0_3] : memref<640x256xbf16, #tpu.memory_space<vmem>>, vector<640x256xbf16>
    %cst = arith.constant dense<0.000000e+00> : vector<56x256xf32>
    %9 = tpu.matmul %7, %8, %cst {dimension_numbers = #tpu.dot_dimension_numbers<[1], [0], [0], [1], [0, 0, 1, 1], [], []>} : vector<56x640xbf16>, vector<640x256xbf16>, vector<56x256xf32> -> vector<56x256xf32>
    %10 = vector.extract_strided_slice %9 {offsets = [0, 0], sizes = [56, 128], strides = [1, 1]} : vector<56x256xf32> to vector<56x128xf32>
    %11 = vector.extract_strided_slice %9 {offsets = [0, 128], sizes = [56, 128], strides = [1, 1]} : vector<56x256xf32> to vector<56x128xf32>
    %12 = arith.maximumf %10, %11 : vector<56x128xf32>
    %c0_4 = arith.constant 0 : index
    %c0_5 = arith.constant 0 : index
    %13 = vector.load %arg3[%c0_4, %c0_5] : memref<1x128xf32, #tpu.memory_space<vmem>>, vector<1x128xf32>
    %14 = vector.broadcast %13 : vector<1x128xf32> to vector<56x128xf32>
    %15 = arith.addf %12, %14 : vector<56x128xf32>
    %cst_6 = arith.constant 0.000000e+00 : f32
    %16 = vector.broadcast %cst_6 : f32 to vector<56x128xf32>
    %17 = arith.maximumf %15, %16 : vector<56x128xf32>
    %18 = vector.extract_strided_slice %17 {offsets = [0, 0], sizes = [48, 128], strides = [1, 1]} : vector<56x128xf32> to vector<48x128xf32>
    %19 = vector.extract_strided_slice %17 {offsets = [1, 0], sizes = [48, 128], strides = [1, 1]} : vector<56x128xf32> to vector<48x128xf32>
    %20 = arith.maximumf %18, %19 : vector<48x128xf32>
    %21 = arith.truncf %20 : vector<48x128xf32> to vector<48x128xbf16>
    %22 = vector.extract_strided_slice %21 {offsets = [0, 0], sizes = [40, 128], strides = [1, 1]} : vector<48x128xbf16> to vector<40x128xbf16>
    %23 = vector.extract_strided_slice %21 {offsets = [2, 0], sizes = [40, 128], strides = [1, 1]} : vector<48x128xbf16> to vector<40x128xbf16>
    %24 = vector.extract_strided_slice %21 {offsets = [4, 0], sizes = [40, 128], strides = [1, 1]} : vector<48x128xbf16> to vector<40x128xbf16>
    %25 = vector.extract_strided_slice %21 {offsets = [6, 0], sizes = [40, 128], strides = [1, 1]} : vector<48x128xbf16> to vector<40x128xbf16>
    %26 = vector.extract_strided_slice %21 {offsets = [8, 0], sizes = [40, 128], strides = [1, 1]} : vector<48x128xbf16> to vector<40x128xbf16>
    %27 = tpu.concatenate %22, %23, %24, %25, %26 in 1 : vector<40x128xbf16>, vector<40x128xbf16>, vector<40x128xbf16>, vector<40x128xbf16>, vector<40x128xbf16> -> vector<40x640xbf16>
    %c0_7 = arith.constant 0 : index
    %c0_8 = arith.constant 0 : index
    %28 = vector.load %arg4[%c0_7, %c0_8] : memref<640x256xbf16, #tpu.memory_space<vmem>>, vector<640x256xbf16>
    %cst_9 = arith.constant dense<0.000000e+00> : vector<40x256xf32>
    %29 = tpu.matmul %27, %28, %cst_9 {dimension_numbers = #tpu.dot_dimension_numbers<[1], [0], [0], [1], [0, 0, 1, 1], [], []>} : vector<40x640xbf16>, vector<640x256xbf16>, vector<40x256xf32> -> vector<40x256xf32>
    %30 = vector.extract_strided_slice %29 {offsets = [0, 0], sizes = [40, 128], strides = [1, 1]} : vector<40x256xf32> to vector<40x128xf32>
    %31 = vector.extract_strided_slice %29 {offsets = [0, 128], sizes = [40, 128], strides = [1, 1]} : vector<40x256xf32> to vector<40x128xf32>
    %32 = arith.maximumf %30, %31 : vector<40x128xf32>
    %c0_10 = arith.constant 0 : index
    %c0_11 = arith.constant 0 : index
    %33 = vector.load %arg5[%c0_10, %c0_11] : memref<1x128xf32, #tpu.memory_space<vmem>>, vector<1x128xf32>
    %34 = vector.broadcast %33 : vector<1x128xf32> to vector<40x128xf32>
    %35 = arith.addf %32, %34 : vector<40x128xf32>
    %cst_12 = arith.constant 0.000000e+00 : f32
    %36 = vector.broadcast %cst_12 : f32 to vector<40x128xf32>
    %37 = arith.maximumf %35, %36 : vector<40x128xf32>
    %38 = vector.extract_strided_slice %37 {offsets = [0, 0], sizes = [32, 128], strides = [1, 1]} : vector<40x128xf32> to vector<32x128xf32>
    %39 = vector.extract_strided_slice %37 {offsets = [2, 0], sizes = [32, 128], strides = [1, 1]} : vector<40x128xf32> to vector<32x128xf32>
    %40 = arith.maximumf %38, %39 : vector<32x128xf32>
    %41 = vector.shape_cast %40 : vector<32x128xf32> to vector<1x32x128xf32>
    %42 = vector.extract_strided_slice %41 {offsets = [0, 0, 0], sizes = [1, 1, 128], strides = [1, 1, 1]} : vector<1x32x128xf32> to vector<1x1x128xf32>
    %43 = vector.shape_cast %42 : vector<1x1x128xf32> to vector<1x128xf32>
    %44 = vector.extract_strided_slice %41 {offsets = [0, 4, 0], sizes = [1, 1, 128], strides = [1, 1, 1]} : vector<1x32x128xf32> to vector<1x1x128xf32>
    %45 = vector.shape_cast %44 : vector<1x1x128xf32> to vector<1x128xf32>
    %46 = vector.extract_strided_slice %41 {offsets = [0, 8, 0], sizes = [1, 1, 128], strides = [1, 1, 1]} : vector<1x32x128xf32> to vector<1x1x128xf32>
    %47 = vector.shape_cast %46 : vector<1x1x128xf32> to vector<1x128xf32>
    %48 = vector.extract_strided_slice %41 {offsets = [0, 12, 0], sizes = [1, 1, 128], strides = [1, 1, 1]} : vector<1x32x128xf32> to vector<1x1x128xf32>
    %49 = vector.shape_cast %48 : vector<1x1x128xf32> to vector<1x128xf32>
    %50 = vector.extract_strided_slice %41 {offsets = [0, 16, 0], sizes = [1, 1, 128], strides = [1, 1, 1]} : vector<1x32x128xf32> to vector<1x1x128xf32>
    %51 = vector.shape_cast %50 : vector<1x1x128xf32> to vector<1x128xf32>
    %52 = tpu.concatenate %43, %45, %47, %49, %51 in 1 : vector<1x128xf32>, vector<1x128xf32>, vector<1x128xf32>, vector<1x128xf32>, vector<1x128xf32> -> vector<1x640xf32>
    %53 = arith.truncf %52 : vector<1x640xf32> to vector<1x640xbf16>
    %cst_13 = arith.constant 0.000000e+00 : bf16
    %54 = vector.broadcast %cst_13 : bf16 to vector<7x640xbf16>
    %55 = tpu.concatenate %53, %54 in 0 : vector<1x640xbf16>, vector<7x640xbf16> -> vector<8x640xbf16>
    %c0_14 = arith.constant 0 : index
    %c0_15 = arith.constant 0 : index
    %56 = vector.load %arg6[%c0_14, %c0_15] : memref<640x128xbf16, #tpu.memory_space<vmem>>, vector<640x128xbf16>
    %cst_16 = arith.constant dense<0.000000e+00> : vector<8x128xf32>
    %57 = tpu.matmul %55, %56, %cst_16 {dimension_numbers = #tpu.dot_dimension_numbers<[1], [0], [0], [1], [0, 0, 1, 1], [], []>} : vector<8x640xbf16>, vector<640x128xbf16>, vector<8x128xf32> -> vector<8x128xf32>
    %c0_17 = arith.constant 0 : index
    %c0_18 = arith.constant 0 : index
    %58 = vector.load %arg7[%c0_17, %c0_18] : memref<1x128xf32, #tpu.memory_space<vmem>>, vector<1x128xf32>
    %59 = vector.broadcast %58 : vector<1x128xf32> to vector<8x128xf32>
    %60 = arith.addf %57, %59 : vector<8x128xf32>
    %cst_19 = arith.constant 0.000000e+00 : f32
    %61 = vector.broadcast %cst_19 : f32 to vector<8x128xf32>
    %62 = arith.maximumf %60, %61 : vector<8x128xf32>
    %63 = arith.truncf %62 : vector<8x128xf32> to vector<8x128xbf16>
    %c0_20 = arith.constant 0 : index
    %c0_21 = arith.constant 0 : index
    %64 = vector.load %arg8[%c0_20, %c0_21] : memref<128x128xbf16, #tpu.memory_space<vmem>>, vector<128x128xbf16>
    %cst_22 = arith.constant dense<0.000000e+00> : vector<8x128xf32>
    %65 = tpu.matmul %63, %64, %cst_22 {dimension_numbers = #tpu.dot_dimension_numbers<[1], [0], [0], [1], [0, 0, 1, 1], [], []>} : vector<8x128xbf16>, vector<128x128xbf16>, vector<8x128xf32> -> vector<8x128xf32>
    %c0_23 = arith.constant 0 : index
    %c0_24 = arith.constant 0 : index
    %66 = vector.load %arg9[%c0_23, %c0_24] : memref<1x128xf32, #tpu.memory_space<vmem>>, vector<1x128xf32>
    %67 = vector.broadcast %66 : vector<1x128xf32> to vector<8x128xf32>
    %68 = arith.addf %65, %67 : vector<8x128xf32>
    %cst_25 = arith.constant 0.000000e+00 : f32
    %69 = vector.broadcast %cst_25 : f32 to vector<8x128xf32>
    %70 = arith.maximumf %68, %69 : vector<8x128xf32>
    %71 = arith.truncf %70 : vector<8x128xf32> to vector<8x128xbf16>
    %c0_26 = arith.constant 0 : index
    %c0_27 = arith.constant 0 : index
    %72 = vector.load %arg10[%c0_26, %c0_27] : memref<128x128xbf16, #tpu.memory_space<vmem>>, vector<128x128xbf16>
    %cst_28 = arith.constant dense<0.000000e+00> : vector<8x128xf32>
    %73 = tpu.matmul %71, %72, %cst_28 {dimension_numbers = #tpu.dot_dimension_numbers<[1], [0], [0], [1], [0, 0, 1, 1], [], []>} : vector<8x128xbf16>, vector<128x128xbf16>, vector<8x128xf32> -> vector<8x128xf32>
    %c0_29 = arith.constant 0 : index
    %c0_30 = arith.constant 0 : index
    %74 = vector.load %arg11[%c0_29, %c0_30] : memref<1x128xf32, #tpu.memory_space<vmem>>, vector<1x128xf32>
    %75 = vector.broadcast %74 : vector<1x128xf32> to vector<8x128xf32>
    %76 = arith.addf %73, %75 : vector<8x128xf32>
    %77 = vector.extract_strided_slice %76 {offsets = [0, 0], sizes = [1, 128], strides = [1, 1]} : vector<8x128xf32> to vector<1x128xf32>
    %c0_31 = arith.constant 0 : index
    %c0_32 = arith.constant 0 : index
    %c0_33 = arith.constant 0 : index
    %78 = vector.load %arg12[%c0_31, %c0_32, %c0_33] : memref<1x1x128xf32, #tpu.memory_space<vmem>>, vector<1x1x128xf32>
    %79 = vector.shape_cast %78 : vector<1x1x128xf32> to vector<1x128xf32>
    %80 = vector.shape_cast %77 : vector<1x128xf32> to vector<1x1x128xf32>
    tpu.vector_store %arg12[%c0_31, %c0_32, %c0_33], %80 {strides = array<i32>} : memref<1x1x128xf32, #tpu.memory_space<vmem>>, vector<1x1x128xf32>,
    return
  }
  func.func @transform_0(%arg0: i32) -> (i32, i32, i32) {
    %c0_i32 = arith.constant 0 : i32
    %c0_i32_0 = arith.constant 0 : i32
    %c0_i32_1 = arith.constant 0 : i32
    return %arg0, %c0_i32, %c0_i32_0 : i32, i32, i32
  }
  func.func @transform_1(%arg0: i32) -> (i32, i32) {
    %c0_i32 = arith.constant 0 : i32
    %c0_i32_0 = arith.constant 0 : i32
    %c0_i32_1 = arith.constant 0 : i32
    return %c0_i32, %c0_i32_0 : i32, i32
  }
  func.func @transform_2(%arg0: i32) -> (i32, i32) {
    %c0_i32 = arith.constant 0 : i32
    %c0_i32_0 = arith.constant 0 : i32
    %c0_i32_1 = arith.constant 0 : i32
    return %c0_i32, %c0_i32_0 : i32, i32
  }
  func.func @transform_3(%arg0: i32) -> (i32, i32) {
    %c0_i32 = arith.constant 0 : i32
    %c0_i32_0 = arith.constant 0 : i32
    %c0_i32_1 = arith.constant 0 : i32
    return %c0_i32, %c0_i32_0 : i32, i32
  }
  func.func @transform_4(%arg0: i32) -> (i32, i32) {
    %c0_i32 = arith.constant 0 : i32
    %c0_i32_0 = arith.constant 0 : i32
    %c0_i32_1 = arith.constant 0 : i32
    return %c0_i32, %c0_i32_0 : i32, i32
  }
  func.func @transform_5(%arg0: i32) -> (i32, i32) {
    %c0_i32 = arith.constant 0 : i32
    %c0_i32_0 = arith.constant 0 : i32
    %c0_i32_1 = arith.constant 0 : i32
    return %c0_i32, %c0_i32_0 : i32, i32
  }
  func.func @transform_6(%arg0: i32) -> (i32, i32) {
    %c0_i32 = arith.constant 0 : i32
    %c0_i32_0 = arith.constant 0 : i32
    %c0_i32_1 = arith.constant 0 : i32
    return %c0_i32, %c0_i32_0 : i32, i32
  }
  func.func @transform_7(%arg0: i32) -> (i32, i32) {
    %c0_i32 = arith.constant 0 : i32
    %c0_i32_0 = arith.constant 0 : i32
    %c0_i32_1 = arith.constant 0 : i32
    return %c0_i32, %c0_i32_0 : i32, i32
  }
  func.func @transform_8(%arg0: i32) -> (i32, i32) {
    %c0_i32 = arith.constant 0 : i32
    %c0_i32_0 = arith.constant 0 : i32
    %c0_i32_1 = arith.constant 0 : i32
    return %c0_i32, %c0_i32_0 : i32, i32
  }
  func.func @transform_9(%arg0: i32) -> (i32, i32) {
    %c0_i32 = arith.constant 0 : i32
    %c0_i32_0 = arith.constant 0 : i32
    %c0_i32_1 = arith.constant 0 : i32
    return %c0_i32, %c0_i32_0 : i32, i32
  }
  func.func @transform_10(%arg0: i32) -> (i32, i32) {
    %c0_i32 = arith.constant 0 : i32
    %c0_i32_0 = arith.constant 0 : i32
    %c0_i32_1 = arith.constant 0 : i32
    return %c0_i32, %c0_i32_0 : i32, i32
  }
  func.func @transform_11(%arg0: i32) -> (i32, i32, i32) {
    %c0_i32 = arith.constant 0 : i32
    %c0_i32_0 = arith.constant 0 : i32
    %c0_i32_1 = arith.constant 0 : i32
    return %arg0, %c0_i32, %c0_i32_0 : i32, i32, i32
  }
}

</mosaic_0001>

<llo_original>
// kernel: danknet_forward.1
$region0: #{danknet_forward.1}
  #allocation0 [shape = 'u32[]', space=smem, size = 0x4, offset = 0x4, fixed_abs, tag = 'smem constant byte address 0x4 - core index']
  #allocation1 [shape = 'u32[144,128]{1,0:T(1,128)}', space=vmem, size = 0x12000, scoped, tag = 'internal scratch']
  %s0 = inlined_call_operand.vmem [shape: bf16[2,64,128], index: 0, kind: input, shape index: {}]
  %s1 = inlined_call_operand.vmem [shape: bf16[640,256], index: 1, kind: input, shape index: {}]
  %s2 = inlined_call_operand.vmem [shape: f32[1,128], index: 2, kind: input, shape index: {}]
  %s3 = inlined_call_operand.hbm [shape: bf16[640,256], index: 3, kind: input, shape index: {}]
  %s4 = inlined_call_operand.vmem [shape: f32[1,128], index: 4, kind: input, shape index: {}]
  %s5 = inlined_call_operand.vmem [shape: bf16[640,128], index: 5, kind: input, shape index: {}]
  %s6 = inlined_call_operand.vmem [shape: f32[1,128], index: 6, kind: input, shape index: {}]
  %s7 = inlined_call_operand.vmem [shape: bf16[128,128], index: 7, kind: input, shape index: {}]
  %s8 = inlined_call_operand.vmem [shape: f32[1,128], index: 8, kind: input, shape index: {}]
  %s9 = inlined_call_operand.hbm [shape: bf16[128,128], index: 9, kind: input, shape index: {}]
  %s10 = inlined_call_operand.vmem [shape: f32[1,128], index: 10, kind: input, shape index: {}]
  %s11 = inlined_call_operand.hbm [shape: f32[2,1,128], index: 11, kind: output, shape index: {}]
  %s12 = sld [smem:[#allocation0]]
  $region85: #{danknet_forward.1} parent=0
    _
  %s14 = ssub.s32 1, %s12
  %s15 = scalar_select 0, %s14, %s12
  $region1: #{danknet_forward.1} parent=0
    #allocation2 [shape = 'u8[327680]{0}', space=vmem, size = 0x50000, scoped, tag = 'input window, operand 3, single buffered']
    #allocation3 [shape = 's32[2]{0}', space=sflag, size = 0x8, scoped, tag = 'scoped memory for danknet_forward.1']
    #allocation4 [shape = 's32[2]{0}', space=sflag, size = 0x8, scoped, tag = 'scoped memory for danknet_forward.1']
    #allocation5 [shape = 'u8[32768]{0}', space=vmem, size = 0x8000, scoped, tag = 'input window, operand 9, single buffered']
    #allocation6 [shape = 's32[1]{0}', space=sflag, size = 0x4, scoped, tag = 'scoped memory for danknet_forward.1']
    #allocation7 [shape = 'u8[1024]{0}', space=vmem, size = 0x400, scoped, tag = 'output window, operand 0']
    %16 = vsyncpa [#allocation3], 0
    %17 = vsyncpa [#allocation6], 0
    %18 = vsyncpa [#allocation4], 0
    %s19 = scalar_lea.sflag [#allocation4], 1
    %20 = vsyncpa %s19, 0
    loop: start=0, step=1, limit=4
    $region2: #{danknet_forward.1} parent=1 // loop_pre_header
      _
    $region3: #{danknet_forward.1} parent=1 // loop_header
      %s22 = sphi 0, %s26
      %p23 = scmp.ge.s32.totalorder %s22, 4
      %s32 = sphi 0, %s34
      %s35 = sphi 0, %s32
      %s36 = sphi 0, %s35
      %s52 = sphi 0, %s36
      %s56 = sphi 0, %s56
      %s58 = sphi 0, %s56
      %s59 = sphi 0, %s58
      %s73 = sphi 0, %s59
      %s77 = sphi 0, %s77
      %s79 = sphi 0, %s77
      %s80 = sphi 0, %s79
      %s94 = sphi 0, %s80
      %s98 = sphi 0, %s98
      %s100 = sphi 0, %s98
      %s101 = sphi 0, %s100
      %s115 = sphi 0, %s101
      %s119 = sphi 0, %s119
      %s121 = sphi 0, %s119
      %s122 = sphi 0, %s121
      %s136 = sphi 0, %s122
      %s140 = sphi 0, %s140
      %s142 = sphi 0, %s140
      %s143 = sphi 0, %s142
      %s157 = sphi 0, %s143
      %s161 = sphi 0, %s161
      %s163 = sphi 0, %s161
      %s164 = sphi 0, %s163
      %s178 = sphi 0, %s164
      %s182 = sphi 0, %s182
      %s184 = sphi 0, %s182
      %s185 = sphi 0, %s184
      %s199 = sphi 0, %s185
      %s203 = sphi 0, %s203
      %s205 = sphi 0, %s203
      %s206 = sphi 0, %s205
      %s220 = sphi 0, %s206
      %s224 = sphi 0, %s224
      %s226 = sphi 0, %s224
      %s227 = sphi 0, %s226
      %s241 = sphi 0, %s227
      %s245 = sphi 0, %s245
      %s247 = sphi 0, %s245
      %s248 = sphi 0, %s247
      %s262 = sphi 0, %s248
      %s268 = sphi 0, %s270
      %s271 = sphi 0, %s268
      %s272 = sphi 0, %s271
      %s288 = sphi 0, %s272
    $region4: #{danknet_forward.1} parent=1 // loop_header_branch
      %25 = sbr.rel (%p23) target = $region8
    $region5: #{danknet_forward.1} parent=1 // loop_body
      %s27 = ssub.s32 %s22, 1
      %s28 = ssub.s32 %s22, 2
      %s29 = sadd.s32 %s22, 1
      %s30 = ssub.s32 %s22, %s29
      %p31 = scmp.eq.s32.totalorder %s30, 0
      %s33 = sadd.s32 %s32, 1
      %s34 = scalar_select %p31, %s32, %s33
      %p37 = pneg %p31
      %p38 = scmp.eq.s32.totalorder %s22, 1
      %p39 = por %p37, %p38
      %p40 = scmp.ne.s32.totalorder %s32, %s35
      %p41 = scmp.eq.s32.totalorder %s22, 0
      %p42 = por %p40, %p41
      %p43 = scmp.ne.s32.totalorder %s32, %s35
      %p44 = scmp.eq.s32.totalorder %s27, 1
      %p45 = por %p43, %p44
      %p46 = scmp.ne.s32.totalorder %s35, %s36
      %p47 = scmp.eq.s32.totalorder %s27, 0
      %p48 = por %p46, %p47
      %p49 = scmp.ne.s32.totalorder %s35, %s36
      %p50 = scmp.eq.s32.totalorder %s28, 1
      %p51 = por %p49, %p50
      %p53 = scmp.ne.s32.totalorder %s36, %s52
      %p54 = scmp.eq.s32.totalorder %s28, 0
      %p55 = por %p53, %p54
      %s57 = sadd.s32 %s56, 1
      %p60 = scmp.eq.s32.totalorder %s22, 1
      %p61 = scmp.ne.s32.totalorder %s56, %s58
      %p62 = scmp.eq.s32.totalorder %s22, 0
      %p63 = por %p61, %p62
      %p64 = scmp.ne.s32.totalorder %s56, %s58
      %p65 = scmp.eq.s32.totalorder %s27, 1
      %p66 = por %p64, %p65
      %p67 = scmp.ne.s32.totalorder %s58, %s59
      %p68 = scmp.eq.s32.totalorder %s27, 0
      %p69 = por %p67, %p68
      %p70 = scmp.ne.s32.totalorder %s58, %s59
      %p71 = scmp.eq.s32.totalorder %s28, 1
      %p72 = por %p70, %p71
      %p74 = scmp.ne.s32.totalorder %s59, %s73
      %p75 = scmp.eq.s32.totalorder %s28, 0
      %p76 = por %p74, %p75
      %s78 = sadd.s32 %s77, 1
      %p81 = scmp.eq.s32.totalorder %s22, 1
      %p82 = scmp.ne.s32.totalorder %s77, %s79
      %p83 = scmp.eq.s32.totalorder %s22, 0
      %p84 = por %p82, %p83
      %p85 = scmp.ne.s32.totalorder %s77, %s79
      %p86 = scmp.eq.s32.totalorder %s27, 1
      %p87 = por %p85, %p86
      %p88 = scmp.ne.s32.totalorder %s79, %s80
      %p89 = scmp.eq.s32.totalorder %s27, 0
      %p90 = por %p88, %p89
      %p91 = scmp.ne.s32.totalorder %s79, %s80
      %p92 = scmp.eq.s32.totalorder %s28, 1
      %p93 = por %p91, %p92
      %p95 = scmp.ne.s32.totalorder %s80, %s94
      %p96 = scmp.eq.s32.totalorder %s28, 0
      %p97 = por %p95, %p96
      %s99 = sadd.s32 %s98, 1
      %p102 = scmp.eq.s32.totalorder %s22, 1
      %p103 = scmp.ne.s32.totalorder %s98, %s100
      %p104 = scmp.eq.s32.totalorder %s22, 0
      %p105 = por %p103, %p104
      %p106 = scmp.ne.s32.totalorder %s98, %s100
      %p107 = scmp.eq.s32.totalorder %s27, 1
      %p108 = por %p106, %p107
      %p109 = scmp.ne.s32.totalorder %s100, %s101
      %p110 = scmp.eq.s32.totalorder %s27, 0
      %p111 = por %p109, %p110
      %p112 = scmp.ne.s32.totalorder %s100, %s101
      %p113 = scmp.eq.s32.totalorder %s28, 1
      %p114 = por %p112, %p113
      %p116 = scmp.ne.s32.totalorder %s101, %s115
      %p117 = scmp.eq.s32.totalorder %s28, 0
      %p118 = por %p116, %p117
      %s120 = sadd.s32 %s119, 1
      %p123 = scmp.eq.s32.totalorder %s22, 1
      %p124 = scmp.ne.s32.totalorder %s119, %s121
      %p125 = scmp.eq.s32.totalorder %s22, 0
      %p126 = por %p124, %p125
      %p127 = scmp.ne.s32.totalorder %s119, %s121
      %p128 = scmp.eq.s32.totalorder %s27, 1
      %p129 = por %p127, %p128
      %p130 = scmp.ne.s32.totalorder %s121, %s122
      %p131 = scmp.eq.s32.totalorder %s27, 0
      %p132 = por %p130, %p131
      %p133 = scmp.ne.s32.totalorder %s121, %s122
      %p134 = scmp.eq.s32.totalorder %s28, 1
      %p135 = por %p133, %p134
      %p137 = scmp.ne.s32.totalorder %s122, %s136
      %p138 = scmp.eq.s32.totalorder %s28, 0
      %p139 = por %p137, %p138
      %s141 = sadd.s32 %s140, 1
      %p144 = scmp.eq.s32.totalorder %s22, 1
      %p145 = scmp.ne.s32.totalorder %s140, %s142
      %p146 = scmp.eq.s32.totalorder %s22, 0
      %p147 = por %p145, %p146
      %p148 = scmp.ne.s32.totalorder %s140, %s142
      %p149 = scmp.eq.s32.totalorder %s27, 1
      %p150 = por %p148, %p149
      %p151 = scmp.ne.s32.totalorder %s142, %s143
      %p152 = scmp.eq.s32.totalorder %s27, 0
      %p153 = por %p151, %p152
      %p154 = scmp.ne.s32.totalorder %s142, %s143
      %p155 = scmp.eq.s32.totalorder %s28, 1
      %p156 = por %p154, %p155
      %p158 = scmp.ne.s32.totalorder %s143, %s157
      %p159 = scmp.eq.s32.totalorder %s28, 0
      %p160 = por %p158, %p159
      %s162 = sadd.s32 %s161, 1
      %p165 = scmp.eq.s32.totalorder %s22, 1
      %p166 = scmp.ne.s32.totalorder %s161, %s163
      %p167 = scmp.eq.s32.totalorder %s22, 0
      %p168 = por %p166, %p167
      %p169 = scmp.ne.s32.totalorder %s161, %s163
      %p170 = scmp.eq.s32.totalorder %s27, 1
      %p171 = por %p169, %p170
      %p172 = scmp.ne.s32.totalorder %s163, %s164
      %p173 = scmp.eq.s32.totalorder %s27, 0
      %p174 = por %p172, %p173
      %p175 = scmp.ne.s32.totalorder %s163, %s164
      %p176 = scmp.eq.s32.totalorder %s28, 1
      %p177 = por %p175, %p176
      %p179 = scmp.ne.s32.totalorder %s164, %s178
      %p180 = scmp.eq.s32.totalorder %s28, 0
      %p181 = por %p179, %p180
      %s183 = sadd.s32 %s182, 1
      %p186 = scmp.eq.s32.totalorder %s22, 1
      %p187 = scmp.ne.s32.totalorder %s182, %s184
      %p188 = scmp.eq.s32.totalorder %s22, 0
      %p189 = por %p187, %p188
      %p190 = scmp.ne.s32.totalorder %s182, %s184
      %p191 = scmp.eq.s32.totalorder %s27, 1
      %p192 = por %p190, %p191
      %p193 = scmp.ne.s32.totalorder %s184, %s185
      %p194 = scmp.eq.s32.totalorder %s27, 0
      %p195 = por %p193, %p194
      %p196 = scmp.ne.s32.totalorder %s184, %s185
      %p197 = scmp.eq.s32.totalorder %s28, 1
      %p198 = por %p196, %p197
      %p200 = scmp.ne.s32.totalorder %s185, %s199
      %p201 = scmp.eq.s32.totalorder %s28, 0
      %p202 = por %p200, %p201
      %s204 = sadd.s32 %s203, 1
      %p207 = scmp.eq.s32.totalorder %s22, 1
      %p208 = scmp.ne.s32.totalorder %s203, %s205
      %p209 = scmp.eq.s32.totalorder %s22, 0
      %p210 = por %p208, %p209
      %p211 = scmp.ne.s32.totalorder %s203, %s205
      %p212 = scmp.eq.s32.totalorder %s27, 1
      %p213 = por %p211, %p212
      %p214 = scmp.ne.s32.totalorder %s205, %s206
      %p215 = scmp.eq.s32.totalorder %s27, 0
      %p216 = por %p214, %p215
      %p217 = scmp.ne.s32.totalorder %s205, %s206
      %p218 = scmp.eq.s32.totalorder %s28, 1
      %p219 = por %p217, %p218
      %p221 = scmp.ne.s32.totalorder %s206, %s220
      %p222 = scmp.eq.s32.totalorder %s28, 0
      %p223 = por %p221, %p222
      %s225 = sadd.s32 %s224, 1
      %p228 = scmp.eq.s32.totalorder %s22, 1
      %p229 = scmp.ne.s32.totalorder %s224, %s226
      %p230 = scmp.eq.s32.totalorder %s22, 0
      %p231 = por %p229, %p230
      %p232 = scmp.ne.s32.totalorder %s224, %s226
      %p233 = scmp.eq.s32.totalorder %s27, 1
      %p234 = por %p232, %p233
      %p235 = scmp.ne.s32.totalorder %s226, %s227
      %p236 = scmp.eq.s32.totalorder %s27, 0
      %p237 = por %p235, %p236
      %p238 = scmp.ne.s32.totalorder %s226, %s227
      %p239 = scmp.eq.s32.totalorder %s28, 1
      %p240 = por %p238, %p239
      %p242 = scmp.ne.s32.totalorder %s227, %s241
      %p243 = scmp.eq.s32.totalorder %s28, 0
      %p244 = por %p242, %p243
      %s246 = sadd.s32 %s245, 1
      %p249 = scmp.eq.s32.totalorder %s22, 1
      %p250 = scmp.ne.s32.totalorder %s245, %s247
      %p251 = scmp.eq.s32.totalorder %s22, 0
      %p252 = por %p250, %p251
      %p253 = scmp.ne.s32.totalorder %s245, %s247
      %p254 = scmp.eq.s32.totalorder %s27, 1
      %p255 = por %p253, %p254
      %p256 = scmp.ne.s32.totalorder %s247, %s248
      %p257 = scmp.eq.s32.totalorder %s27, 0
      %p258 = por %p256, %p257
      %p259 = scmp.ne.s32.totalorder %s247, %s248
      %p260 = scmp.eq.s32.totalorder %s28, 1
      %p261 = por %p259, %p260
      %p263 = scmp.ne.s32.totalorder %s248, %s262
      %p264 = scmp.eq.s32.totalorder %s28, 0
      %p265 = por %p263, %p264
      %s266 = ssub.s32 %s22, %s29
      %p267 = scmp.eq.s32.totalorder %s266, 0
      %s269 = sadd.s32 %s268, 1
      %s270 = scalar_select %p267, %s268, %s269
      %p273 = pneg %p267
      %p274 = scmp.eq.s32.totalorder %s22, 1
      %p275 = por %p273, %p274
      %p276 = scmp.ne.s32.totalorder %s268, %s271
      %p277 = scmp.eq.s32.totalorder %s22, 0
      %p278 = por %p276, %p277
      %p279 = scmp.ne.s32.totalorder %s268, %s271
      %p280 = scmp.eq.s32.totalorder %s27, 1
      %p281 = por %p279, %p280
      %p282 = scmp.ne.s32.totalorder %s271, %s272
      %p283 = scmp.eq.s32.totalorder %s27, 0
      %p284 = por %p282, %p283
      %p285 = scmp.ne.s32.totalorder %s271, %s272
      %p286 = scmp.eq.s32.totalorder %s28, 1
      %p287 = por %p285, %p286
      %p289 = scmp.ne.s32.totalorder %s272, %s288
      %p290 = scmp.eq.s32.totalorder %s28, 0
      %p291 = por %p289, %p290
      %p292 = scmp.le.s32.totalorder 1, %s22
      %p293 = scmp.lt.s32.totalorder %s22, 3
      %p294 = pnand %p292, %p293
      %p295 = pneg %p294
      // Predicated region
      $region9: #{danknet_forward.1} parent=5 // pred_check
        _
      $region10: #{danknet_forward.1} parent=5 // pred_check_branch
        %297 = sbr.rel (%p294) target = $region12
      $region11: #{danknet_forward.1} parent=5 // pred_region
        %s298 = ssub.s32 %s22, 1
        // Predicated region
        $region13: #{danknet_forward.1} parent=11 // pred_check
          %p299 = pneg %p69
        $region14: #{danknet_forward.1} parent=11 // pred_check_branch
          %301 = sbr.rel (%p299) target = $region16
        $region15: #{danknet_forward.1} parent=11 // pred_region
          _
        $region16: #{danknet_forward.1} parent=11 // pred_fallthru
          _
        // Predicated region
        $region17: #{danknet_forward.1} parent=11 // pred_check
          %p302 = pneg %p90
        $region18: #{danknet_forward.1} parent=11 // pred_check_branch
          %304 = sbr.rel (%p302) target = $region20
        $region19: #{danknet_forward.1} parent=11 // pred_region
          _
        $region20: #{danknet_forward.1} parent=11 // pred_fallthru
          _
        // Predicated region
        $region21: #{danknet_forward.1} parent=11 // pred_check
          %p305 = pneg %p111
        $region22: #{danknet_forward.1} parent=11 // pred_check_branch
          %307 = sbr.rel (%p305) target = $region24
        $region23: #{danknet_forward.1} parent=11 // pred_region
          %s309 = ssub.s32 10240, 10240
          %310 = vsyncadd [#allocation3], %s309
          %s311 = sshll.u32 [#allocation2], 4
          %s312 = int_to_ptr.vmem [resolvable:$true] %s311
          %317 = dma.hbm_to_vmem [thread:$0]  %s3, 10240, %s312, [#allocation3], 128, 128, 8
        $region24: #{danknet_forward.1} parent=11 // pred_fallthru
          _
        // Predicated region
        $region25: #{danknet_forward.1} parent=11 // pred_check
          %p318 = pneg %p132
        $region26: #{danknet_forward.1} parent=11 // pred_check_branch
          %320 = sbr.rel (%p318) target = $region28
        $region27: #{danknet_forward.1} parent=11 // pred_region
          _
        $region28: #{danknet_forward.1} parent=11 // pred_fallthru
          _
        // Predicated region
        $region29: #{danknet_forward.1} parent=11 // pred_check
          %p321 = pneg %p153
        $region30: #{danknet_forward.1} parent=11 // pred_check_branch
          %323 = sbr.rel (%p321) target = $region32
        $region31: #{danknet_forward.1} parent=11 // pred_region
          _
        $region32: #{danknet_forward.1} parent=11 // pred_fallthru
          _
        // Predicated region
        $region33: #{danknet_forward.1} parent=11 // pred_check
          %p324 = pneg %p174
        $region34: #{danknet_forward.1} parent=11 // pred_check_branch
          %326 = sbr.rel (%p324) target = $region36
        $region35: #{danknet_forward.1} parent=11 // pred_region
          _
        $region36: #{danknet_forward.1} parent=11 // pred_fallthru
          _
        // Predicated region
        $region37: #{danknet_forward.1} parent=11 // pred_check
          %p327 = pneg %p195
        $region38: #{danknet_forward.1} parent=11 // pred_check_branch
          %329 = sbr.rel (%p327) target = $region40
        $region39: #{danknet_forward.1} parent=11 // pred_region
          _
        $region40: #{danknet_forward.1} parent=11 // pred_fallthru
          _
        // Predicated region
        $region41: #{danknet_forward.1} parent=11 // pred_check
          %p330 = pneg %p216
        $region42: #{danknet_forward.1} parent=11 // pred_check_branch
          %332 = sbr.rel (%p330) target = $region44
        $region43: #{danknet_forward.1} parent=11 // pred_region
          _
        $region44: #{danknet_forward.1} parent=11 // pred_fallthru
          _
        // Predicated region
        $region45: #{danknet_forward.1} parent=11 // pred_check
          %p333 = pneg %p237
        $region46: #{danknet_forward.1} parent=11 // pred_check_branch
          %335 = sbr.rel (%p333) target = $region48
        $region47: #{danknet_forward.1} parent=11 // pred_region
          %s337 = ssub.s32 1024, 1024
          %338 = vsyncadd [#allocation6], %s337
          %s339 = sshll.u32 [#allocation5], 4
          %s340 = int_to_ptr.vmem [resolvable:$true] %s339
          %345 = dma.hbm_to_vmem [thread:$0]  %s9, 1024, %s340, [#allocation6], 64, 64, 4
        $region48: #{danknet_forward.1} parent=11 // pred_fallthru
          _
        // Predicated region
        $region49: #{danknet_forward.1} parent=11 // pred_check
          %p346 = pneg %p258
        $region50: #{danknet_forward.1} parent=11 // pred_check_branch
          %348 = sbr.rel (%p346) target = $region52
        $region51: #{danknet_forward.1} parent=11 // pred_region
          _
        $region52: #{danknet_forward.1} parent=11 // pred_fallthru
          _
      $region12: #{danknet_forward.1} parent=5 // pred_fallthru
        _
      %p349 = scmp.lt.s32.totalorder %s22, 2
      // Predicated region
      $region53: #{danknet_forward.1} parent=5 // pred_check
        %p350 = pneg %p349
      $region54: #{danknet_forward.1} parent=5 // pred_check_branch
        %352 = sbr.rel (%p350) target = $region56
      $region55: #{danknet_forward.1} parent=5 // pred_region
        // Predicated region
        $region57: #{danknet_forward.1} parent=55 // pred_check
          %p353 = pneg %p42
        $region58: #{danknet_forward.1} parent=55 // pred_check_branch
          %355 = sbr.rel (%p353) target = $region60
        $region59: #{danknet_forward.1} parent=55 // pred_region
          %p356 = scmp.lt.s32.totalorder %s22, 1
          %s357 = scalar_select %p356, %s22, 1
          %s358 = smul.addr %s357, 8
          %s359 = smul.addr %s358, 4
          %s360 = scalar_lea.vmem %s0, %s359
        $region60: #{danknet_forward.1} parent=55 // pred_fallthru
          _
      $region56: #{danknet_forward.1} parent=5 // pred_fallthru
        _
      %p361 = scmp.le.s32.totalorder 1, %s22
      %p362 = scmp.lt.s32.totalorder %s22, 3
      %p363 = pnand %p361, %p362
      %p364 = pneg %p363
      // Predicated region
      $region61: #{danknet_forward.1} parent=5 // pred_check
        _
      $region62: #{danknet_forward.1} parent=5 // pred_check_branch
        %366 = sbr.rel (%p363) target = $region64
      $region63: #{danknet_forward.1} parent=5 // pred_region
        %s367 = ssub.s32 %s22, 1
        // Predicated region
        $region65: #{danknet_forward.1} parent=63 // pred_check
          %p368 = pneg %p111
        $region66: #{danknet_forward.1} parent=63 // pred_check_branch
          %370 = sbr.rel (%p368) target = $region68
        $region67: #{danknet_forward.1} parent=63 // pred_region
          %371 = dma.done [#allocation3], 10240
        $region68: #{danknet_forward.1} parent=63 // pred_fallthru
          _
        // Predicated region
        $region69: #{danknet_forward.1} parent=63 // pred_check
          %p372 = pneg %p237
        $region70: #{danknet_forward.1} parent=63 // pred_check_branch
          %374 = sbr.rel (%p372) target = $region72
        $region71: #{danknet_forward.1} parent=63 // pred_region
          %375 = dma.done [#allocation6], 1024
        $region72: #{danknet_forward.1} parent=63 // pred_fallthru
          _
        %p376 = scmp.lt.s32.totalorder %s27, 1
        %s377 = scalar_select %p376, %s27, 1
        %s378 = smul.addr %s377, 8
        %s379 = smul.addr %s378, 4
        %s380 = scalar_lea.vmem %s0, %s379
        %p381 = pneg %p48
        %p382 = pneg %p45
        %p383 = pneg %p69
        %p384 = pneg %p66
        %p385 = pneg %p90
        %p386 = pneg %p87
        %p387 = pneg %p111
        %p388 = pneg %p108
        %p389 = pneg %p132
        %p390 = pneg %p129
        %p391 = pneg %p153
        %p392 = pneg %p150
        %p393 = pneg %p174
        %p394 = pneg %p171
        %p395 = pneg %p195
        %p396 = pneg %p192
        %p397 = pneg %p216
        %p398 = pneg %p213
        %p399 = pneg %p237
        %p400 = pneg %p234
        %p401 = pneg %p258
        %p402 = pneg %p255
        %p403 = pneg %p284
        %p404 = pneg %p281
        %s405 = sand.u32 %s271, 1
        %s406 = scalar_lea.sflag [#allocation4], %s405
        %s407 = sand.u32 %s271, 1
        %s408 = scalar_lea.vmem [#allocation7], %s407
        %p409 = scmp.lt.s32.totalorder %s27, 1
        %s410 = scalar_select %p409, %s27, 1
        %s411 = smul.addr %s410, 8
        %s412 = smul.addr %s411, 4
        %s413 = scalar_lea.vmem %s0, %s412
        %v415 = vld [vmem:[%s413] sm:$0xf]
        %v416 = vld [vmem:[%s413 + $0x4] sm:$0xf]
        %v417 = vld [vmem:[%s413 + $0x8] sm:$0xf]
        %v418 = vld [vmem:[%s413 + $0xc] sm:$0xf]
        %v419 = vld [vmem:[%s413 + $0x10] sm:$0xf]
        %v420 = vld [vmem:[%s413 + $0x14] sm:$0xf]
        %v421 = vld [vmem:[%s413 + $0x18] sm:$0xf]
        %v422 = vld [vmem:[%s413 + $0x1c] sm:$0xf]
        %v430 = vunpack.c.l.b16 %v415
        %v431 = vunpack.c.l.b16 %v416
        %v432 = vunpack.c.l.b16 %v417
        %v433 = vunpack.c.l.b16 %v418
        %v434 = vunpack.c.l.b16 %v419
        %v435 = vunpack.c.l.b16 %v420
        %v436 = vunpack.c.l.b16 %v421
        %v437 = vpack.c.b16 %v431, %v430
        %v438 = vpack.c.b16 %v433, %v432
        %v439 = vpack.c.b16 %v435, %v434
        %v440 = vpack.c.b16 %v436, %v436
        %v446 = vunpack.c.l.b16 %v422
        %v447 = vpack.c.b16 %v446, %v436
        %vm448 = vsmask.f32 7424
        %v450 = vshrl.u32 %v437, 16
        %v452 = vshll.u32 %v437, 16
        %v454 = vrot.slane %v452, 1
        %v455 = vor.u32 %v450, %v454
        %v457 = vshll.u32 %v438, 16
        %v459 = vrot.slane %v457, 1
        %v460 = vsel %vm448, %v455, %v459
        %v461 = vshrl.u32 %v438, 16
        %v463 = vor.u32 %v461, %v459
        %v465 = vshll.u32 %v439, 16
        %v467 = vrot.slane %v465, 1
        %v468 = vsel %vm448, %v463, %v467
        %v469 = vshrl.u32 %v439, 16
        %v471 = vor.u32 %v469, %v467
        %v473 = vshll.u32 %v447, 16
        %v475 = vrot.slane %v473, 1
        %v476 = vsel %vm448, %v471, %v475
        %v477 = vshrl.u32 %v447, 16
        %v479 = vor.u32 %v477, %v475
        %vm484 = vcmask 1046528
        %v485 = vrot.slane %v437, 1
        %v486 = vrot.slane %v438, 1
        %v487 = vsel %vm484, %v485, %v486
        %v488 = vrot.slane %v439, 1
        %v489 = vsel %vm484, %v486, %v488
        %v490 = vrot.slane %v447, 1
        %v491 = vsel %vm484, %v488, %v490
        %vm496 = vsmask.f32 6400
        %v497 = vrot.slane %v450, 1
        %v498 = vrot.slane %v452, 2
        %v499 = vor.u32 %v497, %v498
        %v500 = vrot.slane %v461, 1
        %v501 = vrot.slane %v457, 2
        %v502 = vor.u32 %v500, %v501
        %v503 = vsel %vm496, %v499, %v502
        %v504 = vrot.slane %v469, 1
        %v505 = vrot.slane %v465, 2
        %v506 = vor.u32 %v504, %v505
        %v507 = vsel %vm496, %v502, %v506
        %v508 = vrot.slane %v477, 1
        %v509 = vrot.slane %v473, 2
        %v510 = vor.u32 %v508, %v509
        %v511 = vsel %vm496, %v506, %v510
        %vm516 = vcmask 1045504
        %v517 = vrot.slane %v437, 2
        %v518 = vrot.slane %v438, 2
        %v519 = vsel %vm516, %v517, %v518
        %v520 = vrot.slane %v439, 2
        %v521 = vsel %vm516, %v518, %v520
        %v522 = vrot.slane %v447, 2
        %v523 = vsel %vm516, %v520, %v522
        %v528 = vld [vmem:[%s1] sm:$0xff]
        %v529 = vld [vmem:[%s1 + $0x8] sm:$0xff]
        %v530 = vld [vmem:[%s1 + $0x10] sm:$0xff]
        %v531 = vld [vmem:[%s1 + $0x18] sm:$0xff]
        %v532 = vld [vmem:[%s1 + $0x20] sm:$0xff]
        %v533 = vld [vmem:[%s1 + $0x28] sm:$0xff]
        %v534 = vld [vmem:[%s1 + $0x30] sm:$0xff]
        %v535 = vld [vmem:[%s1 + $0x38] sm:$0xff]
        %v536 = vld [vmem:[%s1 + $0x40] sm:$0xff]
        %v537 = vld [vmem:[%s1 + $0x48] sm:$0xff]
        %v538 = vld [vmem:[%s1 + $0x50] sm:$0xff]
        %v539 = vld [vmem:[%s1 + $0x58] sm:$0xff]
        %v540 = vld [vmem:[%s1 + $0x60] sm:$0xff]
        %v541 = vld [vmem:[%s1 + $0x68] sm:$0xff]
        %v542 = vld [vmem:[%s1 + $0x70] sm:$0xff]
        %v543 = vld [vmem:[%s1 + $0x78] sm:$0xff]
        %v544 = vld [vmem:[%s1 + $0x80] sm:$0xff]
        %v545 = vld [vmem:[%s1 + $0x88] sm:$0xff]
        %v546 = vld [vmem:[%s1 + $0x90] sm:$0xff]
        %v547 = vld [vmem:[%s1 + $0x98] sm:$0xff]
        %v548 = vld [vmem:[%s1 + $0xa0] sm:$0xff]
        %v549 = vld [vmem:[%s1 + $0xa8] sm:$0xff]
        %v550 = vld [vmem:[%s1 + $0xb0] sm:$0xff]
        %v551 = vld [vmem:[%s1 + $0xb8] sm:$0xff]
        %v552 = vld [vmem:[%s1 + $0xc0] sm:$0xff]
        %v553 = vld [vmem:[%s1 + $0xc8] sm:$0xff]
        %v554 = vld [vmem:[%s1 + $0xd0] sm:$0xff]
        %v555 = vld [vmem:[%s1 + $0xd8] sm:$0xff]
        %v556 = vld [vmem:[%s1 + $0xe0] sm:$0xff]
        %v557 = vld [vmem:[%s1 + $0xe8] sm:$0xff]
        %v558 = vld [vmem:[%s1 + $0xf0] sm:$0xff]
        %v559 = vld [vmem:[%s1 + $0xf8] sm:$0xff]
        %v560 = vld [vmem:[%s1 + $0x100] sm:$0xff]
        %v561 = vld [vmem:[%s1 + $0x108] sm:$0xff]
        %v562 = vld [vmem:[%s1 + $0x110] sm:$0xff]
        %v563 = vld [vmem:[%s1 + $0x118] sm:$0xff]
        %v564 = vld [vmem:[%s1 + $0x120] sm:$0xff]
        %v565 = vld [vmem:[%s1 + $0x128] sm:$0xff]
        %v566 = vld [vmem:[%s1 + $0x130] sm:$0xff]
        %v567 = vld [vmem:[%s1 + $0x138] sm:$0xff]
        %v568 = vld [vmem:[%s1 + $0x140] sm:$0xff]
        %v569 = vld [vmem:[%s1 + $0x148] sm:$0xff]
        %v570 = vld [vmem:[%s1 + $0x150] sm:$0xff]
        %v571 = vld [vmem:[%s1 + $0x158] sm:$0xff]
        %v572 = vld [vmem:[%s1 + $0x160] sm:$0xff]
        %v573 = vld [vmem:[%s1 + $0x168] sm:$0xff]
        %v574 = vld [vmem:[%s1 + $0x170] sm:$0xff]
        %v575 = vld [vmem:[%s1 + $0x178] sm:$0xff]
        %v576 = vld [vmem:[%s1 + $0x180] sm:$0xff]
        %v577 = vld [vmem:[%s1 + $0x188] sm:$0xff]
        %v578 = vld [vmem:[%s1 + $0x190] sm:$0xff]
        %v579 = vld [vmem:[%s1 + $0x198] sm:$0xff]
        %v580 = vld [vmem:[%s1 + $0x1a0] sm:$0xff]
        %v581 = vld [vmem:[%s1 + $0x1a8] sm:$0xff]
        %v582 = vld [vmem:[%s1 + $0x1b0] sm:$0xff]
        %v583 = vld [vmem:[%s1 + $0x1b8] sm:$0xff]
        %v584 = vld [vmem:[%s1 + $0x1c0] sm:$0xff]
        %v585 = vld [vmem:[%s1 + $0x1c8] sm:$0xff]
        %v586 = vld [vmem:[%s1 + $0x1d0] sm:$0xff]
        %v587 = vld [vmem:[%s1 + $0x1d8] sm:$0xff]
        %v588 = vld [vmem:[%s1 + $0x1e0] sm:$0xff]
        %v589 = vld [vmem:[%s1 + $0x1e8] sm:$0xff]
        %v590 = vld [vmem:[%s1 + $0x1f0] sm:$0xff]
        %v591 = vld [vmem:[%s1 + $0x1f8] sm:$0xff]
        %v592 = vld [vmem:[%s1 + $0x200] sm:$0xff]
        %v593 = vld [vmem:[%s1 + $0x208] sm:$0xff]
        %v594 = vld [vmem:[%s1 + $0x210] sm:$0xff]
        %v595 = vld [vmem:[%s1 + $0x218] sm:$0xff]
        %v596 = vld [vmem:[%s1 + $0x220] sm:$0xff]
        %v597 = vld [vmem:[%s1 + $0x228] sm:$0xff]
        %v598 = vld [vmem:[%s1 + $0x230] sm:$0xff]
        %v599 = vld [vmem:[%s1 + $0x238] sm:$0xff]
        %v600 = vld [vmem:[%s1 + $0x240] sm:$0xff]
        %v601 = vld [vmem:[%s1 + $0x248] sm:$0xff]
        %v602 = vld [vmem:[%s1 + $0x250] sm:$0xff]
        %v603 = vld [vmem:[%s1 + $0x258] sm:$0xff]
        %v604 = vld [vmem:[%s1 + $0x260] sm:$0xff]
        %v605 = vld [vmem:[%s1 + $0x268] sm:$0xff]
        %v606 = vld [vmem:[%s1 + $0x270] sm:$0xff]
        %v607 = vld [vmem:[%s1 + $0x278] sm:$0xff]
        %v688 = vunpack.c.l.b16 %v528
        %v689 = vunpack.c.h.b16 %v528
        %v690 = vunpack.c.l.b16 %v529
        %v691 = vunpack.c.h.b16 %v529
        %v692 = vunpack.c.l.b16 %v530
        %v693 = vunpack.c.h.b16 %v530
        %v694 = vunpack.c.l.b16 %v531
        %v695 = vunpack.c.h.b16 %v531
        %v696 = vunpack.c.l.b16 %v532
        %v697 = vunpack.c.h.b16 %v532
        %v698 = vunpack.c.l.b16 %v533
        %v699 = vunpack.c.h.b16 %v533
        %v700 = vunpack.c.l.b16 %v534
        %v701 = vunpack.c.h.b16 %v534
        %v702 = vunpack.c.l.b16 %v535
        %v703 = vunpack.c.h.b16 %v535
        %v704 = vunpack.c.l.b16 %v536
        %v705 = vunpack.c.h.b16 %v536
        %v706 = vunpack.c.l.b16 %v537
        %v707 = vunpack.c.h.b16 %v537
        %v708 = vunpack.c.l.b16 %v538
        %v709 = vunpack.c.h.b16 %v538
        %v710 = vunpack.c.l.b16 %v539
        %v711 = vunpack.c.h.b16 %v539
        %v712 = vunpack.c.l.b16 %v540
        %v713 = vunpack.c.h.b16 %v540
        %v714 = vunpack.c.l.b16 %v541
        %v715 = vunpack.c.h.b16 %v541
        %v716 = vunpack.c.l.b16 %v542
        %v717 = vunpack.c.h.b16 %v542
        %v718 = vunpack.c.l.b16 %v543
        %v719 = vunpack.c.h.b16 %v543
        %v720 = vunpack.c.l.b16 %v544
        %v721 = vunpack.c.h.b16 %v544
        %v722 = vunpack.c.l.b16 %v545
        %v723 = vunpack.c.h.b16 %v545
        %v724 = vunpack.c.l.b16 %v546
        %v725 = vunpack.c.h.b16 %v546
        %v726 = vunpack.c.l.b16 %v547
        %v727 = vunpack.c.h.b16 %v547
        %v728 = vunpack.c.l.b16 %v548
        %v729 = vunpack.c.h.b16 %v548
        %v730 = vunpack.c.l.b16 %v549
        %v731 = vunpack.c.h.b16 %v549
        %v732 = vunpack.c.l.b16 %v550
        %v733 = vunpack.c.h.b16 %v550
        %v734 = vunpack.c.l.b16 %v551
        %v735 = vunpack.c.h.b16 %v551
        %v736 = vunpack.c.l.b16 %v552
        %v737 = vunpack.c.h.b16 %v552
        %v738 = vunpack.c.l.b16 %v553
        %v739 = vunpack.c.h.b16 %v553
        %v740 = vunpack.c.l.b16 %v554
        %v741 = vunpack.c.h.b16 %v554
        %v742 = vunpack.c.l.b16 %v555
        %v743 = vunpack.c.h.b16 %v555
        %v744 = vunpack.c.l.b16 %v556
        %v745 = vunpack.c.h.b16 %v556
        %v746 = vunpack.c.l.b16 %v557
        %v747 = vunpack.c.h.b16 %v557
        %v748 = vunpack.c.l.b16 %v558
        %v749 = vunpack.c.h.b16 %v558
        %v750 = vunpack.c.l.b16 %v559
        %v751 = vunpack.c.h.b16 %v559
        %v752 = vunpack.c.l.b16 %v560
        %v753 = vunpack.c.h.b16 %v560
        %v754 = vunpack.c.l.b16 %v561
        %v755 = vunpack.c.h.b16 %v561
        %v756 = vunpack.c.l.b16 %v562
        %v757 = vunpack.c.h.b16 %v562
        %v758 = vunpack.c.l.b16 %v563
        %v759 = vunpack.c.h.b16 %v563
        %v760 = vunpack.c.l.b16 %v564
        %v761 = vunpack.c.h.b16 %v564
        %v762 = vunpack.c.l.b16 %v565
        %v763 = vunpack.c.h.b16 %v565
        %v764 = vunpack.c.l.b16 %v566
        %v765 = vunpack.c.h.b16 %v566
        %v766 = vunpack.c.l.b16 %v567
        %v767 = vunpack.c.h.b16 %v567
        %v768 = vunpack.c.l.b16 %v568
        %v769 = vunpack.c.h.b16 %v568
        %v770 = vunpack.c.l.b16 %v569
        %v771 = vunpack.c.h.b16 %v569
        %v772 = vunpack.c.l.b16 %v570
        %v773 = vunpack.c.h.b16 %v570
        %v774 = vunpack.c.l.b16 %v571
        %v775 = vunpack.c.h.b16 %v571
        %v776 = vunpack.c.l.b16 %v572
        %v777 = vunpack.c.h.b16 %v572
        %v778 = vunpack.c.l.b16 %v573
        %v779 = vunpack.c.h.b16 %v573
        %v780 = vunpack.c.l.b16 %v574
        %v781 = vunpack.c.h.b16 %v574
        %v782 = vunpack.c.l.b16 %v575
        %v783 = vunpack.c.h.b16 %v575
        %v784 = vunpack.c.l.b16 %v576
        %v785 = vunpack.c.h.b16 %v576
        %v786 = vunpack.c.l.b16 %v577
        %v787 = vunpack.c.h.b16 %v577
        %v788 = vunpack.c.l.b16 %v578
        %v789 = vunpack.c.h.b16 %v578
        %v790 = vunpack.c.l.b16 %v579
        %v791 = vunpack.c.h.b16 %v579
        %v792 = vunpack.c.l.b16 %v580
        %v793 = vunpack.c.h.b16 %v580
        %v794 = vunpack.c.l.b16 %v581
        %v795 = vunpack.c.h.b16 %v581
        %v796 = vunpack.c.l.b16 %v582
        %v797 = vunpack.c.h.b16 %v582
        %v798 = vunpack.c.l.b16 %v583
        %v799 = vunpack.c.h.b16 %v583
        %v800 = vunpack.c.l.b16 %v584
        %v801 = vunpack.c.h.b16 %v584
        %v802 = vunpack.c.l.b16 %v585
        %v803 = vunpack.c.h.b16 %v585
        %v804 = vunpack.c.l.b16 %v586
        %v805 = vunpack.c.h.b16 %v586
        %v806 = vunpack.c.l.b16 %v587
        %v807 = vunpack.c.h.b16 %v587
        %v808 = vunpack.c.l.b16 %v588
        %v809 = vunpack.c.h.b16 %v588
        %v810 = vunpack.c.l.b16 %v589
        %v811 = vunpack.c.h.b16 %v589
        %v812 = vunpack.c.l.b16 %v590
        %v813 = vunpack.c.h.b16 %v590
        %v814 = vunpack.c.l.b16 %v591
        %v815 = vunpack.c.h.b16 %v591
        %v816 = vunpack.c.l.b16 %v592
        %v817 = vunpack.c.h.b16 %v592
        %v818 = vunpack.c.l.b16 %v593
        %v819 = vunpack.c.h.b16 %v593
        %v820 = vunpack.c.l.b16 %v594
        %v821 = vunpack.c.h.b16 %v594
        %v822 = vunpack.c.l.b16 %v595
        %v823 = vunpack.c.h.b16 %v595
        %v824 = vunpack.c.l.b16 %v596
        %v825 = vunpack.c.h.b16 %v596
        %v826 = vunpack.c.l.b16 %v597
        %v827 = vunpack.c.h.b16 %v597
        %v828 = vunpack.c.l.b16 %v598
        %v829 = vunpack.c.h.b16 %v598
        %v830 = vunpack.c.l.b16 %v599
        %v831 = vunpack.c.h.b16 %v599
        %v832 = vunpack.c.l.b16 %v600
        %v833 = vunpack.c.h.b16 %v600
        %v834 = vunpack.c.l.b16 %v601
        %v835 = vunpack.c.h.b16 %v601
        %v836 = vunpack.c.l.b16 %v602
        %v837 = vunpack.c.h.b16 %v602
        %v838 = vunpack.c.l.b16 %v603
        %v839 = vunpack.c.h.b16 %v603
        %v840 = vunpack.c.l.b16 %v604
        %v841 = vunpack.c.h.b16 %v604
        %v842 = vunpack.c.l.b16 %v605
        %v843 = vunpack.c.h.b16 %v605
        %v844 = vunpack.c.l.b16 %v606
        %v845 = vunpack.c.h.b16 %v606
        %v846 = vunpack.c.l.b16 %v607
        %v847 = vunpack.c.h.b16 %v607
        %v848 = vpack.c.b16 %v690, %v688
        %v849 = vpack.c.b16 %v691, %v689
        %v850 = vpack.c.b16 %v694, %v692
        %v851 = vpack.c.b16 %v695, %v693
        %v852 = vpack.c.b16 %v698, %v696
        %v853 = vpack.c.b16 %v699, %v697
        %v854 = vpack.c.b16 %v702, %v700
        %v855 = vpack.c.b16 %v703, %v701
        %v856 = vpack.c.b16 %v706, %v704
        %v857 = vpack.c.b16 %v707, %v705
        %v858 = vpack.c.b16 %v710, %v708
        %v859 = vpack.c.b16 %v711, %v709
        %v860 = vpack.c.b16 %v714, %v712
        %v861 = vpack.c.b16 %v715, %v713
        %v862 = vpack.c.b16 %v718, %v716
        %v863 = vpack.c.b16 %v719, %v717
        %v864 = vpack.c.b16 %v722, %v720
        %v865 = vpack.c.b16 %v723, %v721
        %v866 = vpack.c.b16 %v726, %v724
        %v867 = vpack.c.b16 %v727, %v725
        %v868 = vpack.c.b16 %v730, %v728
        %v869 = vpack.c.b16 %v731, %v729
        %v870 = vpack.c.b16 %v734, %v732
        %v871 = vpack.c.b16 %v735, %v733
        %v872 = vpack.c.b16 %v738, %v736
        %v873 = vpack.c.b16 %v739, %v737
        %v874 = vpack.c.b16 %v742, %v740
        %v875 = vpack.c.b16 %v743, %v741
        %v876 = vpack.c.b16 %v746, %v744
        %v877 = vpack.c.b16 %v747, %v745
        %v878 = vpack.c.b16 %v750, %v748
        %v879 = vpack.c.b16 %v751, %v749
        %v880 = vpack.c.b16 %v754, %v752
        %v881 = vpack.c.b16 %v755, %v753
        %v882 = vpack.c.b16 %v758, %v756
        %v883 = vpack.c.b16 %v759, %v757
        %v884 = vpack.c.b16 %v762, %v760
        %v885 = vpack.c.b16 %v763, %v761
        %v886 = vpack.c.b16 %v766, %v764
        %v887 = vpack.c.b16 %v767, %v765
        %v888 = vpack.c.b16 %v770, %v768
        %v889 = vpack.c.b16 %v771, %v769
        %v890 = vpack.c.b16 %v774, %v772
        %v891 = vpack.c.b16 %v775, %v773
        %v892 = vpack.c.b16 %v778, %v776
        %v893 = vpack.c.b16 %v779, %v777
        %v894 = vpack.c.b16 %v782, %v780
        %v895 = vpack.c.b16 %v783, %v781
        %v896 = vpack.c.b16 %v786, %v784
        %v897 = vpack.c.b16 %v787, %v785
        %v898 = vpack.c.b16 %v790, %v788
        %v899 = vpack.c.b16 %v791, %v789
        %v900 = vpack.c.b16 %v794, %v792
        %v901 = vpack.c.b16 %v795, %v793
        %v902 = vpack.c.b16 %v798, %v796
        %v903 = vpack.c.b16 %v799, %v797
        %v904 = vpack.c.b16 %v802, %v800
        %v905 = vpack.c.b16 %v803, %v801
        %v906 = vpack.c.b16 %v806, %v804
        %v907 = vpack.c.b16 %v807, %v805
        %v908 = vpack.c.b16 %v810, %v808
        %v909 = vpack.c.b16 %v811, %v809
        %v910 = vpack.c.b16 %v814, %v812
        %v911 = vpack.c.b16 %v815, %v813
        %v912 = vpack.c.b16 %v818, %v816
        %v913 = vpack.c.b16 %v819, %v817
        %v914 = vpack.c.b16 %v822, %v820
        %v915 = vpack.c.b16 %v823, %v821
        %v916 = vpack.c.b16 %v826, %v824
        %v917 = vpack.c.b16 %v827, %v825
        %v918 = vpack.c.b16 %v830, %v828
        %v919 = vpack.c.b16 %v831, %v829
        %v920 = vpack.c.b16 %v834, %v832
        %v921 = vpack.c.b16 %v835, %v833
        %v922 = vpack.c.b16 %v838, %v836
        %v923 = vpack.c.b16 %v839, %v837
        %v924 = vpack.c.b16 %v842, %v840
        %v925 = vpack.c.b16 %v843, %v841
        %v926 = vpack.c.b16 %v846, %v844
        %v927 = vpack.c.b16 %v847, %v845
        %1008 = vmatprep.subr.bf16.mxu0 %v849
        %1009 = vmatpush1.bf16.msra.mxu0 %v848
        %1010 = vmatprep.subr.bf16.mxu0 %v851
        %1011 = vmatpush1.bf16.msra.mxu0 %v850
        %1012 = vmatprep.subr.bf16.mxu0 %v853
        %1013 = vmatpush1.bf16.msra.mxu0 %v852
        %1014 = vmatprep.subr.bf16.mxu0 %v855
        %1015 = vmatpush1.bf16.msra.mxu0 %v854
        %1016 = vmatprep.subr.bf16.mxu0 %v857
        %1017 = vmatpush1.bf16.msra.mxu0 %v856
        %1018 = vmatprep.subr.bf16.mxu0 %v859
        %1019 = vmatpush1.bf16.msra.mxu0 %v858
        %1020 = vmatprep.subr.bf16.mxu0 %v861
        %1021 = vmatpush1.bf16.msra.mxu0 %v860
        %1022 = vmatprep.subr.bf16.mxu0 %v863
        %1023 = vmatpush1.bf16.msra.mxu0 %v862
        %1024 = vmatprep.subr.bf16.mxu0 %v865
        %1025 = vmatpush1.bf16.msra.mxu0 %v864
        %1026 = vmatprep.subr.bf16.mxu0 %v867
        %1027 = vmatpush1.bf16.msra.mxu0 %v866
        %1028 = vmatprep.subr.bf16.mxu0 %v869
        %1029 = vmatpush1.bf16.msra.mxu0 %v868
        %1030 = vmatprep.subr.bf16.mxu0 %v871
        %1031 = vmatpush1.bf16.msra.mxu0 %v870
        %1032 = vmatprep.subr.bf16.mxu0 %v873
        %1033 = vmatpush1.bf16.msra.mxu0 %v872
        %1034 = vmatprep.subr.bf16.mxu0 %v875
        %1035 = vmatpush1.bf16.msra.mxu0 %v874
        %1036 = vmatprep.subr.bf16.mxu0 %v877
        %1037 = vmatpush1.bf16.msra.mxu0 %v876
        %1038 = vmatprep.subr.bf16.mxu0 %v879
        %1039 = vmatpush1.bf16.msra.mxu0 %v878
        %1040 = vmatprep.mubr.bf16.mxu0 %v460
        %1041 = vmatmul.mubr.bf16.gmra.mrb[0].mxu0 %v437
        %v1042 = vpop.f32.mrb[0].mxu0
        %v1043 = vadd.f32 0.0, %v1042
        %v1044 = vpop.f32.mrb[0].mxu0
        %v1045 = vadd.f32 0.0, %v1044
        %v1046 = vpop.f32.mrb[0].mxu0
        %v1047 = vadd.f32 0.0, %v1046
        %v1048 = vpop.f32.mrb[0].mxu0
        %v1049 = vadd.f32 0.0, %v1048
        %1050 = vmatprep.mubr.bf16.mxu0 %v468
        %1051 = vmatmul.mubr.bf16.gmra.mrb[0].mxu0 %v438
        %v1052 = vpop.f32.mrb[0].mxu0
        %v1053 = vadd.f32 0.0, %v1052
        %v1054 = vpop.f32.mrb[0].mxu0
        %v1055 = vadd.f32 0.0, %v1054
        %v1056 = vpop.f32.mrb[0].mxu0
        %v1057 = vadd.f32 0.0, %v1056
        %v1058 = vpop.f32.mrb[0].mxu0
        %v1059 = vadd.f32 0.0, %v1058
        %1060 = vmatprep.mubr.bf16.mxu0 %v476
        %1061 = vmatmul.mubr.bf16.gmra.mrb[0].mxu0 %v439
        %v1062 = vpop.f32.mrb[0].mxu0
        %v1063 = vadd.f32 0.0, %v1062
        %v1064 = vpop.f32.mrb[0].mxu0
        %v1065 = vadd.f32 0.0, %v1064
        %v1066 = vpop.f32.mrb[0].mxu0
        %v1067 = vadd.f32 0.0, %v1066
        %v1068 = vpop.f32.mrb[0].mxu0
        %v1069 = vadd.f32 0.0, %v1068
        %1070 = vmatprep.mubr.bf16.mxu0 %v479
        %1071 = vmatmul.mubr.bf16.gmra.mrb[0].mxu0 %v440
        %v1072 = vpop.f32.mrb[0].mxu0
        %v1073 = vadd.f32 0.0, %v1072
        %v1074 = vpop.f32.mrb[0].mxu0
        %v1075 = vadd.f32 0.0, %v1074
        %v1076 = vpop.f32.mrb[0].mxu0
        %v1077 = vpop.f32.mrb[0].mxu0
        %1078 = vdwg.mxu0
        %1079 = vmatprep.subr.bf16.mxu0 %v881
        %1080 = vmatpush1.bf16.msra.mxu0 %v880
        %1081 = vmatprep.subr.bf16.mxu0 %v883
        %1082 = vmatpush1.bf16.msra.mxu0 %v882
        %1083 = vmatprep.subr.bf16.mxu0 %v885
        %1084 = vmatpush1.bf16.msra.mxu0 %v884
        %1085 = vmatprep.subr.bf16.mxu0 %v887
        %1086 = vmatpush1.bf16.msra.mxu0 %v886
        %1087 = vmatprep.subr.bf16.mxu0 %v889
        %1088 = vmatpush1.bf16.msra.mxu0 %v888
        %1089 = vmatprep.subr.bf16.mxu0 %v891
        %1090 = vmatpush1.bf16.msra.mxu0 %v890
        %1091 = vmatprep.subr.bf16.mxu0 %v893
        %1092 = vmatpush1.bf16.msra.mxu0 %v892
        %1093 = vmatprep.subr.bf16.mxu0 %v895
        %1094 = vmatpush1.bf16.msra.mxu0 %v894
        %1095 = vmatprep.subr.bf16.mxu0 %v897
        %1096 = vmatpush1.bf16.msra.mxu0 %v896
        %1097 = vmatprep.subr.bf16.mxu0 %v899
        %1098 = vmatpush1.bf16.msra.mxu0 %v898
        %1099 = vmatprep.subr.bf16.mxu0 %v901
        %1100 = vmatpush1.bf16.msra.mxu0 %v900
        %1101 = vmatprep.subr.bf16.mxu0 %v903
        %1102 = vmatpush1.bf16.msra.mxu0 %v902
        %1103 = vmatprep.subr.bf16.mxu0 %v905
        %1104 = vmatpush1.bf16.msra.mxu0 %v904
        %1105 = vmatprep.subr.bf16.mxu0 %v907
        %1106 = vmatpush1.bf16.msra.mxu0 %v906
        %1107 = vmatprep.subr.bf16.mxu0 %v909
        %1108 = vmatpush1.bf16.msra.mxu0 %v908
        %1109 = vmatprep.subr.bf16.mxu0 %v911
        %1110 = vmatpush1.bf16.msra.mxu0 %v910
        %1111 = vmatprep.mubr.bf16.mxu0 %v503
        %1112 = vmatmul.mubr.bf16.gmra.mrb[0].mxu0 %v487
        %v1113 = vpop.f32.mrb[0].mxu0
        %v1114 = vadd.f32 %v1043, %v1113
        %v1115 = vpop.f32.mrb[0].mxu0
        %v1116 = vadd.f32 %v1045, %v1115
        %v1117 = vpop.f32.mrb[0].mxu0
        %v1118 = vadd.f32 %v1047, %v1117
        %v1119 = vpop.f32.mrb[0].mxu0
        %v1120 = vadd.f32 %v1049, %v1119
        %1121 = vmatprep.mubr.bf16.mxu0 %v507
        %1122 = vmatmul.mubr.bf16.gmra.mrb[0].mxu0 %v489
        %v1123 = vpop.f32.mrb[0].mxu0
        %v1124 = vadd.f32 %v1053, %v1123
        %v1125 = vpop.f32.mrb[0].mxu0
        %v1126 = vadd.f32 %v1055, %v1125
        %v1127 = vpop.f32.mrb[0].mxu0
        %v1128 = vadd.f32 %v1057, %v1127
        %v1129 = vpop.f32.mrb[0].mxu0
        %v1130 = vadd.f32 %v1059, %v1129
        %1131 = vmatprep.mubr.bf16.mxu0 %v511
        %1132 = vmatmul.mubr.bf16.gmra.mrb[0].mxu0 %v491
        %v1133 = vpop.f32.mrb[0].mxu0
        %v1134 = vadd.f32 %v1063, %v1133
        %v1135 = vpop.f32.mrb[0].mxu0
        %v1136 = vadd.f32 %v1065, %v1135
        %v1137 = vpop.f32.mrb[0].mxu0
        %v1138 = vadd.f32 %v1067, %v1137
        %v1139 = vpop.f32.mrb[0].mxu0
        %v1140 = vadd.f32 %v1069, %v1139
        %1141 = vmatprep.mubr.bf16.mxu0 %v510
        %1142 = vmatmul.mubr.bf16.gmra.mrb[0].mxu0 %v490
        %v1143 = vpop.f32.mrb[0].mxu0
        %v1144 = vadd.f32 %v1073, %v1143
        %v1145 = vpop.f32.mrb[0].mxu0
        %v1146 = vadd.f32 %v1075, %v1145
        %v1147 = vpop.f32.mrb[0].mxu0
        %v1148 = vpop.f32.mrb[0].mxu0
        %1149 = vdwg.mxu0
        %1150 = vmatprep.subr.bf16.mxu0 %v913
        %1151 = vmatpush1.bf16.msra.mxu0 %v912
        %1152 = vmatprep.subr.bf16.mxu0 %v915
        %1153 = vmatpush1.bf16.msra.mxu0 %v914
        %1154 = vmatprep.subr.bf16.mxu0 %v917
        %1155 = vmatpush1.bf16.msra.mxu0 %v916
        %1156 = vmatprep.subr.bf16.mxu0 %v919
        %1157 = vmatpush1.bf16.msra.mxu0 %v918
        %1158 = vmatprep.subr.bf16.mxu0 %v921
        %1159 = vmatpush1.bf16.msra.mxu0 %v920
        %1160 = vmatprep.subr.bf16.mxu0 %v923
        %1161 = vmatpush1.bf16.msra.mxu0 %v922
        %1162 = vmatprep.subr.bf16.mxu0 %v925
        %1163 = vmatpush1.bf16.msra.mxu0 %v924
        %1164 = vmatprep.subr.bf16.mxu0 %v927
        %1165 = vmatpush1.bf16.msra.mxu0 %v926
        %1166 = vmatprep.subr.bf16.mxu0 0
        %1167 = vmatpush1.bf16.msra.mxu0 0
        %1168 = vmatprep.subr.bf16.mxu0 0
        %1169 = vmatpush1.bf16.msra.mxu0 0
        %1170 = vmatprep.subr.bf16.mxu0 0
        %1171 = vmatpush1.bf16.msra.mxu0 0
        %1172 = vmatprep.subr.bf16.mxu0 0
        %1173 = vmatpush1.bf16.msra.mxu0 0
        %1174 = vmatprep.subr.bf16.mxu0 0
        %1175 = vmatpush1.bf16.msra.mxu0 0
        %1176 = vmatprep.subr.bf16.mxu0 0
        %1177 = vmatpush1.bf16.msra.mxu0 0
        %1178 = vmatprep.subr.bf16.mxu0 0
        %1179 = vmatpush1.bf16.msra.mxu0 0
        %1180 = vmatprep.subr.bf16.mxu0 0
        %1181 = vmatpush1.bf16.msra.mxu0 0
        %1182 = vmatprep.mubr.bf16.mxu0 0
        %1183 = vmatmul.mubr.bf16.gmra.mrb[0].mxu0 %v519
        %v1184 = vpop.f32.mrb[0].mxu0
        %v1185 = vadd.f32 %v1114, %v1184
        %v1186 = vpop.f32.mrb[0].mxu0
        %v1187 = vadd.f32 %v1116, %v1186
        %v1188 = vpop.f32.mrb[0].mxu0
        %v1189 = vadd.f32 %v1118, %v1188
        %v1190 = vpop.f32.mrb[0].mxu0
        %v1191 = vadd.f32 %v1120, %v1190
        %1192 = vmatprep.mubr.bf16.mxu0 0
        %1193 = vmatmul.mubr.bf16.gmra.mrb[0].mxu0 %v521
        %v1194 = vpop.f32.mrb[0].mxu0
        %v1195 = vadd.f32 %v1124, %v1194
        %v1196 = vpop.f32.mrb[0].mxu0
        %v1197 = vadd.f32 %v1126, %v1196
        %v1198 = vpop.f32.mrb[0].mxu0
        %v1199 = vadd.f32 %v1128, %v1198
        %v1200 = vpop.f32.mrb[0].mxu0
        %v1201 = vadd.f32 %v1130, %v1200
        %1202 = vmatprep.mubr.bf16.mxu0 0
        %1203 = vmatmul.mubr.bf16.gmra.mrb[0].mxu0 %v523
        %v1204 = vpop.f32.mrb[0].mxu0
        %v1205 = vadd.f32 %v1134, %v1204
        %v1206 = vpop.f32.mrb[0].mxu0
        %v1207 = vadd.f32 %v1136, %v1206
        %v1208 = vpop.f32.mrb[0].mxu0
        %v1209 = vadd.f32 %v1138, %v1208
        %v1210 = vpop.f32.mrb[0].mxu0
        %v1211 = vadd.f32 %v1140, %v1210
        %1212 = vmatprep.mubr.bf16.mxu0 0
        %1213 = vmatmul.mubr.bf16.gmra.mrb[0].mxu0 %v522
        %v1214 = vpop.f32.mrb[0].mxu0
        %v1215 = vadd.f32 %v1144, %v1214
        %v1216 = vpop.f32.mrb[0].mxu0
        %v1217 = vadd.f32 %v1146, %v1216
        %v1218 = vpop.f32.mrb[0].mxu0
        %v1219 = vpop.f32.mrb[0].mxu0
        %1220 = vdwg.mxu0
        %v1221 = vmax.f32 %v1185, %v1187
        %v1222 = vmax.f32 %v1189, %v1191
        %v1223 = vmax.f32 %v1195, %v1197
        %v1224 = vmax.f32 %v1199, %v1201
        %v1225 = vmax.f32 %v1205, %v1207
        %v1226 = vmax.f32 %v1209, %v1211
        %v1227 = vmax.f32 %v1215, %v1217
        %v1228 = vld [vmem:[%s2] sm:$0x1]
        %v1230 = vlaneseq
        %v1231 = vshrl.u32 %v1230, 7
        %v1232 = vsub.s32 0, %v1231
        %v1233 = vrot.slane %v1228, %v1232
        %v1235 = vadd.f32 %v1221, %v1233
        %v1236 = vadd.f32 %v1222, %v1233
        %v1237 = vadd.f32 %v1223, %v1233
        %v1238 = vadd.f32 %v1224, %v1233
        %v1239 = vadd.f32 %v1225, %v1233
        %v1240 = vadd.f32 %v1226, %v1233
        %v1241 = vadd.f32 %v1227, %v1233
        %v1242 = vmax.f32 %v1235, 0.0
        %v1243 = vmax.f32 %v1236, 0.0
        %v1244 = vmax.f32 %v1237, 0.0
        %v1245 = vmax.f32 %v1238, 0.0
        %v1246 = vmax.f32 %v1239, 0.0
        %v1247 = vmax.f32 %v1240, 0.0
        %v1248 = vmax.f32 %v1241, 0.0
        %vm1256 = vcmask 1046528
        %v1257 = vrot.slane %v1242, 1
        %v1258 = vrot.slane %v1243, 1
        %v1259 = vsel %vm1256, %v1257, %v1258
        %v1260 = vrot.slane %v1244, 1
        %v1261 = vsel %vm1256, %v1258, %v1260
        %v1262 = vrot.slane %v1245, 1
        %v1263 = vsel %vm1256, %v1260, %v1262
        %v1264 = vrot.slane %v1246, 1
        %v1265 = vsel %vm1256, %v1262, %v1264
        %v1266 = vrot.slane %v1247, 1
        %v1267 = vsel %vm1256, %v1264, %v1266
        %v1268 = vrot.slane %v1248, 1
        %v1269 = vsel %vm1256, %v1266, %v1268
        %v1276 = vmax.f32 %v1242, %v1259
        %v1277 = vmax.f32 %v1243, %v1261
        %v1278 = vmax.f32 %v1244, %v1263
        %v1279 = vmax.f32 %v1245, %v1265
        %v1280 = vmax.f32 %v1246, %v1267
        %v1281 = vmax.f32 %v1247, %v1269
        %v1282 = vpack.c.bf16 %v1277, %v1276
        %v1283 = vpack.c.bf16 %v1279, %v1278
        %v1284 = vpack.c.bf16 %v1281, %v1280
        %v1288 = vrot.slane %v1282, 1
        %v1289 = vrot.slane %v1283, 1
        %v1290 = vsel %vm484, %v1288, %v1289
        %v1291 = vrot.slane %v1284, 1
        %v1292 = vsel %vm484, %v1289, %v1291
        %v1296 = vrot.slane %v1282, 2
        %v1297 = vrot.slane %v1283, 2
        %v1298 = vsel %vm516, %v1296, %v1297
        %v1299 = vrot.slane %v1284, 2
        %v1300 = vsel %vm516, %v1297, %v1299
        %vm1304 = vcmask 1044480
        %v1305 = vrot.slane %v1282, 3
        %v1306 = vrot.slane %v1283, 3
        %v1307 = vsel %vm1304, %v1305, %v1306
        %v1308 = vrot.slane %v1284, 3
        %v1309 = vsel %vm1304, %v1306, %v1308
        %vm1313 = vcmask 1043456
        %v1314 = vrot.slane %v1282, 4
        %v1315 = vrot.slane %v1283, 4
        %v1316 = vsel %vm1313, %v1314, %v1315
        %v1317 = vrot.slane %v1284, 4
        %v1318 = vsel %vm1313, %v1315, %v1317
        %v1322 = vld [vmem:[#allocation2] sm:$0xff]
        %v1323 = vld [vmem:[#allocation2 + $0x8] sm:$0xff]
        %v1324 = vld [vmem:[#allocation2 + $0x10] sm:$0xff]
        %v1325 = vld [vmem:[#allocation2 + $0x18] sm:$0xff]
        %v1326 = vld [vmem:[#allocation2 + $0x20] sm:$0xff]
        %v1327 = vld [vmem:[#allocation2 + $0x28] sm:$0xff]
        %v1328 = vld [vmem:[#allocation2 + $0x30] sm:$0xff]
        %v1329 = vld [vmem:[#allocation2 + $0x38] sm:$0xff]
        %v1330 = vld [vmem:[#allocation2 + $0x40] sm:$0xff]
        %v1331 = vld [vmem:[#allocation2 + $0x48] sm:$0xff]
        %v1332 = vld [vmem:[#allocation2 + $0x50] sm:$0xff]
        %v1333 = vld [vmem:[#allocation2 + $0x58] sm:$0xff]
        %v1334 = vld [vmem:[#allocation2 + $0x60] sm:$0xff]
        %v1335 = vld [vmem:[#allocation2 + $0x68] sm:$0xff]
        %v1336 = vld [vmem:[#allocation2 + $0x70] sm:$0xff]
        %v1337 = vld [vmem:[#allocation2 + $0x78] sm:$0xff]
        %v1338 = vld [vmem:[#allocation2 + $0x80] sm:$0xff]
        %v1339 = vld [vmem:[#allocation2 + $0x88] sm:$0xff]
        %v1340 = vld [vmem:[#allocation2 + $0x90] sm:$0xff]
        %v1341 = vld [vmem:[#allocation2 + $0x98] sm:$0xff]
        %v1342 = vld [vmem:[#allocation2 + $0xa0] sm:$0xff]
        %v1343 = vld [vmem:[#allocation2 + $0xa8] sm:$0xff]
        %v1344 = vld [vmem:[#allocation2 + $0xb0] sm:$0xff]
        %v1345 = vld [vmem:[#allocation2 + $0xb8] sm:$0xff]
        %v1346 = vld [vmem:[#allocation2 + $0xc0] sm:$0xff]
        %v1347 = vld [vmem:[#allocation2 + $0xc8] sm:$0xff]
        %v1348 = vld [vmem:[#allocation2 + $0xd0] sm:$0xff]
        %v1349 = vld [vmem:[#allocation2 + $0xd8] sm:$0xff]
        %v1350 = vld [vmem:[#allocation2 + $0xe0] sm:$0xff]
        %v1351 = vld [vmem:[#allocation2 + $0xe8] sm:$0xff]
        %v1352 = vld [vmem:[#allocation2 + $0xf0] sm:$0xff]
        %v1353 = vld [vmem:[#allocation2 + $0xf8] sm:$0xff]
        %v1354 = vld [vmem:[#allocation2 + $0x100] sm:$0xff]
        %v1355 = vld [vmem:[#allocation2 + $0x108] sm:$0xff]
        %v1356 = vld [vmem:[#allocation2 + $0x110] sm:$0xff]
        %v1357 = vld [vmem:[#allocation2 + $0x118] sm:$0xff]
        %v1358 = vld [vmem:[#allocation2 + $0x120] sm:$0xff]
        %v1359 = vld [vmem:[#allocation2 + $0x128] sm:$0xff]
        %v1360 = vld [vmem:[#allocation2 + $0x130] sm:$0xff]
        %v1361 = vld [vmem:[#allocation2 + $0x138] sm:$0xff]
        %v1362 = vld [vmem:[#allocation2 + $0x140] sm:$0xff]
        %v1363 = vld [vmem:[#allocation2 + $0x148] sm:$0xff]
        %v1364 = vld [vmem:[#allocation2 + $0x150] sm:$0xff]
        %v1365 = vld [vmem:[#allocation2 + $0x158] sm:$0xff]
        %v1366 = vld [vmem:[#allocation2 + $0x160] sm:$0xff]
        %v1367 = vld [vmem:[#allocation2 + $0x168] sm:$0xff]
        %v1368 = vld [vmem:[#allocation2 + $0x170] sm:$0xff]
        %v1369 = vld [vmem:[#allocation2 + $0x178] sm:$0xff]
        %v1370 = vld [vmem:[#allocation2 + $0x180] sm:$0xff]
        %v1371 = vld [vmem:[#allocation2 + $0x188] sm:$0xff]
        %v1372 = vld [vmem:[#allocation2 + $0x190] sm:$0xff]
        %v1373 = vld [vmem:[#allocation2 + $0x198] sm:$0xff]
        %v1374 = vld [vmem:[#allocation2 + $0x1a0] sm:$0xff]
        %v1375 = vld [vmem:[#allocation2 + $0x1a8] sm:$0xff]
        %v1376 = vld [vmem:[#allocation2 + $0x1b0] sm:$0xff]
        %v1377 = vld [vmem:[#allocation2 + $0x1b8] sm:$0xff]
        %v1378 = vld [vmem:[#allocation2 + $0x1c0] sm:$0xff]
        %v1379 = vld [vmem:[#allocation2 + $0x1c8] sm:$0xff]
        %v1380 = vld [vmem:[#allocation2 + $0x1d0] sm:$0xff]
        %v1381 = vld [vmem:[#allocation2 + $0x1d8] sm:$0xff]
        %v1382 = vld [vmem:[#allocation2 + $0x1e0] sm:$0xff]
        %v1383 = vld [vmem:[#allocation2 + $0x1e8] sm:$0xff]
        %v1384 = vld [vmem:[#allocation2 + $0x1f0] sm:$0xff]
        %v1385 = vld [vmem:[#allocation2 + $0x1f8] sm:$0xff]
        %v1386 = vld [vmem:[#allocation2 + $0x200] sm:$0xff]
        %v1387 = vld [vmem:[#allocation2 + $0x208] sm:$0xff]
        %v1388 = vld [vmem:[#allocation2 + $0x210] sm:$0xff]
        %v1389 = vld [vmem:[#allocation2 + $0x218] sm:$0xff]
        %v1390 = vld [vmem:[#allocation2 + $0x220] sm:$0xff]
        %v1391 = vld [vmem:[#allocation2 + $0x228] sm:$0xff]
        %v1392 = vld [vmem:[#allocation2 + $0x230] sm:$0xff]
        %v1393 = vld [vmem:[#allocation2 + $0x238] sm:$0xff]
        %v1394 = vld [vmem:[#allocation2 + $0x240] sm:$0xff]
        %v1395 = vld [vmem:[#allocation2 + $0x248] sm:$0xff]
        %v1396 = vld [vmem:[#allocation2 + $0x250] sm:$0xff]
        %v1397 = vld [vmem:[#allocation2 + $0x258] sm:$0xff]
        %v1398 = vld [vmem:[#allocation2 + $0x260] sm:$0xff]
        %v1399 = vld [vmem:[#allocation2 + $0x268] sm:$0xff]
        %v1400 = vld [vmem:[#allocation2 + $0x270] sm:$0xff]
        %v1401 = vld [vmem:[#allocation2 + $0x278] sm:$0xff]
        %v1482 = vunpack.c.l.b16 %v1322
        %v1483 = vunpack.c.h.b16 %v1322
        %v1484 = vunpack.c.l.b16 %v1323
        %v1485 = vunpack.c.h.b16 %v1323
        %v1486 = vunpack.c.l.b16 %v1324
        %v1487 = vunpack.c.h.b16 %v1324
        %v1488 = vunpack.c.l.b16 %v1325
        %v1489 = vunpack.c.h.b16 %v1325
        %v1490 = vunpack.c.l.b16 %v1326
        %v1491 = vunpack.c.h.b16 %v1326
        %v1492 = vunpack.c.l.b16 %v1327
        %v1493 = vunpack.c.h.b16 %v1327
        %v1494 = vunpack.c.l.b16 %v1328
        %v1495 = vunpack.c.h.b16 %v1328
        %v1496 = vunpack.c.l.b16 %v1329
        %v1497 = vunpack.c.h.b16 %v1329
        %v1498 = vunpack.c.l.b16 %v1330
        %v1499 = vunpack.c.h.b16 %v1330
        %v1500 = vunpack.c.l.b16 %v1331
        %v1501 = vunpack.c.h.b16 %v1331
        %v1502 = vunpack.c.l.b16 %v1332
        %v1503 = vunpack.c.h.b16 %v1332
        %v1504 = vunpack.c.l.b16 %v1333
        %v1505 = vunpack.c.h.b16 %v1333
        %v1506 = vunpack.c.l.b16 %v1334
        %v1507 = vunpack.c.h.b16 %v1334
        %v1508 = vunpack.c.l.b16 %v1335
        %v1509 = vunpack.c.h.b16 %v1335
        %v1510 = vunpack.c.l.b16 %v1336
        %v1511 = vunpack.c.h.b16 %v1336
        %v1512 = vunpack.c.l.b16 %v1337
        %v1513 = vunpack.c.h.b16 %v1337
        %v1514 = vunpack.c.l.b16 %v1338
        %v1515 = vunpack.c.h.b16 %v1338
        %v1516 = vunpack.c.l.b16 %v1339
        %v1517 = vunpack.c.h.b16 %v1339
        %v1518 = vunpack.c.l.b16 %v1340
        %v1519 = vunpack.c.h.b16 %v1340
        %v1520 = vunpack.c.l.b16 %v1341
        %v1521 = vunpack.c.h.b16 %v1341
        %v1522 = vunpack.c.l.b16 %v1342
        %v1523 = vunpack.c.h.b16 %v1342
        %v1524 = vunpack.c.l.b16 %v1343
        %v1525 = vunpack.c.h.b16 %v1343
        %v1526 = vunpack.c.l.b16 %v1344
        %v1527 = vunpack.c.h.b16 %v1344
        %v1528 = vunpack.c.l.b16 %v1345
        %v1529 = vunpack.c.h.b16 %v1345
        %v1530 = vunpack.c.l.b16 %v1346
        %v1531 = vunpack.c.h.b16 %v1346
        %v1532 = vunpack.c.l.b16 %v1347
        %v1533 = vunpack.c.h.b16 %v1347
        %v1534 = vunpack.c.l.b16 %v1348
        %v1535 = vunpack.c.h.b16 %v1348
        %v1536 = vunpack.c.l.b16 %v1349
        %v1537 = vunpack.c.h.b16 %v1349
        %v1538 = vunpack.c.l.b16 %v1350
        %v1539 = vunpack.c.h.b16 %v1350
        %v1540 = vunpack.c.l.b16 %v1351
        %v1541 = vunpack.c.h.b16 %v1351
        %v1542 = vunpack.c.l.b16 %v1352
        %v1543 = vunpack.c.h.b16 %v1352
        %v1544 = vunpack.c.l.b16 %v1353
        %v1545 = vunpack.c.h.b16 %v1353
        %v1546 = vunpack.c.l.b16 %v1354
        %v1547 = vunpack.c.h.b16 %v1354
        %v1548 = vunpack.c.l.b16 %v1355
        %v1549 = vunpack.c.h.b16 %v1355
        %v1550 = vunpack.c.l.b16 %v1356
        %v1551 = vunpack.c.h.b16 %v1356
        %v1552 = vunpack.c.l.b16 %v1357
        %v1553 = vunpack.c.h.b16 %v1357
        %v1554 = vunpack.c.l.b16 %v1358
        %v1555 = vunpack.c.h.b16 %v1358
        %v1556 = vunpack.c.l.b16 %v1359
        %v1557 = vunpack.c.h.b16 %v1359
        %v1558 = vunpack.c.l.b16 %v1360
        %v1559 = vunpack.c.h.b16 %v1360
        %v1560 = vunpack.c.l.b16 %v1361
        %v1561 = vunpack.c.h.b16 %v1361
        %v1562 = vunpack.c.l.b16 %v1362
        %v1563 = vunpack.c.h.b16 %v1362
        %v1564 = vunpack.c.l.b16 %v1363
        %v1565 = vunpack.c.h.b16 %v1363
        %v1566 = vunpack.c.l.b16 %v1364
        %v1567 = vunpack.c.h.b16 %v1364
        %v1568 = vunpack.c.l.b16 %v1365
        %v1569 = vunpack.c.h.b16 %v1365
        %v1570 = vunpack.c.l.b16 %v1366
        %v1571 = vunpack.c.h.b16 %v1366
        %v1572 = vunpack.c.l.b16 %v1367
        %v1573 = vunpack.c.h.b16 %v1367
        %v1574 = vunpack.c.l.b16 %v1368
        %v1575 = vunpack.c.h.b16 %v1368
        %v1576 = vunpack.c.l.b16 %v1369
        %v1577 = vunpack.c.h.b16 %v1369
        %v1578 = vunpack.c.l.b16 %v1370
        %v1579 = vunpack.c.h.b16 %v1370
        %v1580 = vunpack.c.l.b16 %v1371
        %v1581 = vunpack.c.h.b16 %v1371
        %v1582 = vunpack.c.l.b16 %v1372
        %v1583 = vunpack.c.h.b16 %v1372
        %v1584 = vunpack.c.l.b16 %v1373
        %v1585 = vunpack.c.h.b16 %v1373
        %v1586 = vunpack.c.l.b16 %v1374
        %v1587 = vunpack.c.h.b16 %v1374
        %v1588 = vunpack.c.l.b16 %v1375
        %v1589 = vunpack.c.h.b16 %v1375
        %v1590 = vunpack.c.l.b16 %v1376
        %v1591 = vunpack.c.h.b16 %v1376
        %v1592 = vunpack.c.l.b16 %v1377
        %v1593 = vunpack.c.h.b16 %v1377
        %v1594 = vunpack.c.l.b16 %v1378
        %v1595 = vunpack.c.h.b16 %v1378
        %v1596 = vunpack.c.l.b16 %v1379
        %v1597 = vunpack.c.h.b16 %v1379
        %v1598 = vunpack.c.l.b16 %v1380
        %v1599 = vunpack.c.h.b16 %v1380
        %v1600 = vunpack.c.l.b16 %v1381
        %v1601 = vunpack.c.h.b16 %v1381
        %v1602 = vunpack.c.l.b16 %v1382
        %v1603 = vunpack.c.h.b16 %v1382
        %v1604 = vunpack.c.l.b16 %v1383
        %v1605 = vunpack.c.h.b16 %v1383
        %v1606 = vunpack.c.l.b16 %v1384
        %v1607 = vunpack.c.h.b16 %v1384
        %v1608 = vunpack.c.l.b16 %v1385
        %v1609 = vunpack.c.h.b16 %v1385
        %v1610 = vunpack.c.l.b16 %v1386
        %v1611 = vunpack.c.h.b16 %v1386
        %v1612 = vunpack.c.l.b16 %v1387
        %v1613 = vunpack.c.h.b16 %v1387
        %v1614 = vunpack.c.l.b16 %v1388
        %v1615 = vunpack.c.h.b16 %v1388
        %v1616 = vunpack.c.l.b16 %v1389
        %v1617 = vunpack.c.h.b16 %v1389
        %v1618 = vunpack.c.l.b16 %v1390
        %v1619 = vunpack.c.h.b16 %v1390
        %v1620 = vunpack.c.l.b16 %v1391
        %v1621 = vunpack.c.h.b16 %v1391
        %v1622 = vunpack.c.l.b16 %v1392
        %v1623 = vunpack.c.h.b16 %v1392
        %v1624 = vunpack.c.l.b16 %v1393
        %v1625 = vunpack.c.h.b16 %v1393
        %v1626 = vunpack.c.l.b16 %v1394
        %v1627 = vunpack.c.h.b16 %v1394
        %v1628 = vunpack.c.l.b16 %v1395
        %v1629 = vunpack.c.h.b16 %v1395
        %v1630 = vunpack.c.l.b16 %v1396
        %v1631 = vunpack.c.h.b16 %v1396
        %v1632 = vunpack.c.l.b16 %v1397
        %v1633 = vunpack.c.h.b16 %v1397
        %v1634 = vunpack.c.l.b16 %v1398
        %v1635 = vunpack.c.h.b16 %v1398
        %v1636 = vunpack.c.l.b16 %v1399
        %v1637 = vunpack.c.h.b16 %v1399
        %v1638 = vunpack.c.l.b16 %v1400
        %v1639 = vunpack.c.h.b16 %v1400
        %v1640 = vunpack.c.l.b16 %v1401
        %v1641 = vunpack.c.h.b16 %v1401
        %v1642 = vpack.c.b16 %v1484, %v1482
        %v1643 = vpack.c.b16 %v1485, %v1483
        %v1644 = vpack.c.b16 %v1488, %v1486
        %v1645 = vpack.c.b16 %v1489, %v1487
        %v1646 = vpack.c.b16 %v1492, %v1490
        %v1647 = vpack.c.b16 %v1493, %v1491
        %v1648 = vpack.c.b16 %v1496, %v1494
        %v1649 = vpack.c.b16 %v1497, %v1495
        %v1650 = vpack.c.b16 %v1500, %v1498
        %v1651 = vpack.c.b16 %v1501, %v1499
        %v1652 = vpack.c.b16 %v1504, %v1502
        %v1653 = vpack.c.b16 %v1505, %v1503
        %v1654 = vpack.c.b16 %v1508, %v1506
        %v1655 = vpack.c.b16 %v1509, %v1507
        %v1656 = vpack.c.b16 %v1512, %v1510
        %v1657 = vpack.c.b16 %v1513, %v1511
        %v1658 = vpack.c.b16 %v1516, %v1514
        %v1659 = vpack.c.b16 %v1517, %v1515
        %v1660 = vpack.c.b16 %v1520, %v1518
        %v1661 = vpack.c.b16 %v1521, %v1519
        %v1662 = vpack.c.b16 %v1524, %v1522
        %v1663 = vpack.c.b16 %v1525, %v1523
        %v1664 = vpack.c.b16 %v1528, %v1526
        %v1665 = vpack.c.b16 %v1529, %v1527
        %v1666 = vpack.c.b16 %v1532, %v1530
        %v1667 = vpack.c.b16 %v1533, %v1531
        %v1668 = vpack.c.b16 %v1536, %v1534
        %v1669 = vpack.c.b16 %v1537, %v1535
        %v1670 = vpack.c.b16 %v1540, %v1538
        %v1671 = vpack.c.b16 %v1541, %v1539
        %v1672 = vpack.c.b16 %v1544, %v1542
        %v1673 = vpack.c.b16 %v1545, %v1543
        %v1674 = vpack.c.b16 %v1548, %v1546
        %v1675 = vpack.c.b16 %v1549, %v1547
        %v1676 = vpack.c.b16 %v1552, %v1550
        %v1677 = vpack.c.b16 %v1553, %v1551
        %v1678 = vpack.c.b16 %v1556, %v1554
        %v1679 = vpack.c.b16 %v1557, %v1555
        %v1680 = vpack.c.b16 %v1560, %v1558
        %v1681 = vpack.c.b16 %v1561, %v1559
        %v1682 = vpack.c.b16 %v1564, %v1562
        %v1683 = vpack.c.b16 %v1565, %v1563
        %v1684 = vpack.c.b16 %v1568, %v1566
        %v1685 = vpack.c.b16 %v1569, %v1567
        %v1686 = vpack.c.b16 %v1572, %v1570
        %v1687 = vpack.c.b16 %v1573, %v1571
        %v1688 = vpack.c.b16 %v1576, %v1574
        %v1689 = vpack.c.b16 %v1577, %v1575
        %v1690 = vpack.c.b16 %v1580, %v1578
        %v1691 = vpack.c.b16 %v1581, %v1579
        %v1692 = vpack.c.b16 %v1584, %v1582
        %v1693 = vpack.c.b16 %v1585, %v1583
        %v1694 = vpack.c.b16 %v1588, %v1586
        %v1695 = vpack.c.b16 %v1589, %v1587
        %v1696 = vpack.c.b16 %v1592, %v1590
        %v1697 = vpack.c.b16 %v1593, %v1591
        %v1698 = vpack.c.b16 %v1596, %v1594
        %v1699 = vpack.c.b16 %v1597, %v1595
        %v1700 = vpack.c.b16 %v1600, %v1598
        %v1701 = vpack.c.b16 %v1601, %v1599
        %v1702 = vpack.c.b16 %v1604, %v1602
        %v1703 = vpack.c.b16 %v1605, %v1603
        %v1704 = vpack.c.b16 %v1608, %v1606
        %v1705 = vpack.c.b16 %v1609, %v1607
        %v1706 = vpack.c.b16 %v1612, %v1610
        %v1707 = vpack.c.b16 %v1613, %v1611
        %v1708 = vpack.c.b16 %v1616, %v1614
        %v1709 = vpack.c.b16 %v1617, %v1615
        %v1710 = vpack.c.b16 %v1620, %v1618
        %v1711 = vpack.c.b16 %v1621, %v1619
        %v1712 = vpack.c.b16 %v1624, %v1622
        %v1713 = vpack.c.b16 %v1625, %v1623
        %v1714 = vpack.c.b16 %v1628, %v1626
        %v1715 = vpack.c.b16 %v1629, %v1627
        %v1716 = vpack.c.b16 %v1632, %v1630
        %v1717 = vpack.c.b16 %v1633, %v1631
        %v1718 = vpack.c.b16 %v1636, %v1634
        %v1719 = vpack.c.b16 %v1637, %v1635
        %v1720 = vpack.c.b16 %v1640, %v1638
        %v1721 = vpack.c.b16 %v1641, %v1639
        %1802 = vmatprep.subr.bf16.mxu0 %v1643
        %1803 = vmatpush1.bf16.msra.mxu0 %v1642
        %1804 = vmatprep.subr.bf16.mxu0 %v1645
        %1805 = vmatpush1.bf16.msra.mxu0 %v1644
        %1806 = vmatprep.subr.bf16.mxu0 %v1647
        %1807 = vmatpush1.bf16.msra.mxu0 %v1646
        %1808 = vmatprep.subr.bf16.mxu0 %v1649
        %1809 = vmatpush1.bf16.msra.mxu0 %v1648
        %1810 = vmatprep.subr.bf16.mxu0 %v1651
        %1811 = vmatpush1.bf16.msra.mxu0 %v1650
        %1812 = vmatprep.subr.bf16.mxu0 %v1653
        %1813 = vmatpush1.bf16.msra.mxu0 %v1652
        %1814 = vmatprep.subr.bf16.mxu0 %v1655
        %1815 = vmatpush1.bf16.msra.mxu0 %v1654
        %1816 = vmatprep.subr.bf16.mxu0 %v1657
        %1817 = vmatpush1.bf16.msra.mxu0 %v1656
        %1818 = vmatprep.subr.bf16.mxu0 %v1659
        %1819 = vmatpush1.bf16.msra.mxu0 %v1658
        %1820 = vmatprep.subr.bf16.mxu0 %v1661
        %1821 = vmatpush1.bf16.msra.mxu0 %v1660
        %1822 = vmatprep.subr.bf16.mxu0 %v1663
        %1823 = vmatpush1.bf16.msra.mxu0 %v1662
        %1824 = vmatprep.subr.bf16.mxu0 %v1665
        %1825 = vmatpush1.bf16.msra.mxu0 %v1664
        %1826 = vmatprep.subr.bf16.mxu0 %v1667
        %1827 = vmatpush1.bf16.msra.mxu0 %v1666
        %1828 = vmatprep.subr.bf16.mxu0 %v1669
        %1829 = vmatpush1.bf16.msra.mxu0 %v1668
        %1830 = vmatprep.subr.bf16.mxu0 %v1671
        %1831 = vmatpush1.bf16.msra.mxu0 %v1670
        %1832 = vmatprep.subr.bf16.mxu0 %v1673
        %1833 = vmatpush1.bf16.msra.mxu0 %v1672
        %1834 = vmatprep.mubr.bf16.mxu0 %v1290
        %1835 = vmatmul.mubr.bf16.gmra.mrb[0].mxu0 %v1282
        %v1836 = vpop.f32.mrb[0].mxu0
        %v1837 = vadd.f32 0.0, %v1836
        %v1838 = vpop.f32.mrb[0].mxu0
        %v1839 = vadd.f32 0.0, %v1838
        %v1840 = vpop.f32.mrb[0].mxu0
        %v1841 = vadd.f32 0.0, %v1840
        %v1842 = vpop.f32.mrb[0].mxu0
        %v1843 = vadd.f32 0.0, %v1842
        %1844 = vmatprep.mubr.bf16.mxu0 %v1292
        %1845 = vmatmul.mubr.bf16.gmra.mrb[0].mxu0 %v1283
        %v1846 = vpop.f32.mrb[0].mxu0
        %v1847 = vadd.f32 0.0, %v1846
        %v1848 = vpop.f32.mrb[0].mxu0
        %v1849 = vadd.f32 0.0, %v1848
        %v1850 = vpop.f32.mrb[0].mxu0
        %v1851 = vadd.f32 0.0, %v1850
        %v1852 = vpop.f32.mrb[0].mxu0
        %v1853 = vadd.f32 0.0, %v1852
        %1854 = vmatprep.mubr.bf16.mxu0 %v1291
        %1855 = vmatmul.mubr.bf16.gmra.mrb[0].mxu0 %v1284
        %v1856 = vpop.f32.mrb[0].mxu0
        %v1857 = vpop.f32.mrb[0].mxu0
        %v1858 = vpop.f32.mrb[0].mxu0
        %v1859 = vpop.f32.mrb[0].mxu0
        %1860 = vdwg.mxu0
        %1861 = vmatprep.subr.bf16.mxu0 %v1675
        %1862 = vmatpush1.bf16.msra.mxu0 %v1674
        %1863 = vmatprep.subr.bf16.mxu0 %v1677
        %1864 = vmatpush1.bf16.msra.mxu0 %v1676
        %1865 = vmatprep.subr.bf16.mxu0 %v1679
        %1866 = vmatpush1.bf16.msra.mxu0 %v1678
        %1867 = vmatprep.subr.bf16.mxu0 %v1681
        %1868 = vmatpush1.bf16.msra.mxu0 %v1680
        %1869 = vmatprep.subr.bf16.mxu0 %v1683
        %1870 = vmatpush1.bf16.msra.mxu0 %v1682
        %1871 = vmatprep.subr.bf16.mxu0 %v1685
        %1872 = vmatpush1.bf16.msra.mxu0 %v1684
        %1873 = vmatprep.subr.bf16.mxu0 %v1687
        %1874 = vmatpush1.bf16.msra.mxu0 %v1686
        %1875 = vmatprep.subr.bf16.mxu0 %v1689
        %1876 = vmatpush1.bf16.msra.mxu0 %v1688
        %1877 = vmatprep.subr.bf16.mxu0 %v1691
        %1878 = vmatpush1.bf16.msra.mxu0 %v1690
        %1879 = vmatprep.subr.bf16.mxu0 %v1693
        %1880 = vmatpush1.bf16.msra.mxu0 %v1692
        %1881 = vmatprep.subr.bf16.mxu0 %v1695
        %1882 = vmatpush1.bf16.msra.mxu0 %v1694
        %1883 = vmatprep.subr.bf16.mxu0 %v1697
        %1884 = vmatpush1.bf16.msra.mxu0 %v1696
        %1885 = vmatprep.subr.bf16.mxu0 %v1699
        %1886 = vmatpush1.bf16.msra.mxu0 %v1698
        %1887 = vmatprep.subr.bf16.mxu0 %v1701
        %1888 = vmatpush1.bf16.msra.mxu0 %v1700
        %1889 = vmatprep.subr.bf16.mxu0 %v1703
        %1890 = vmatpush1.bf16.msra.mxu0 %v1702
        %1891 = vmatprep.subr.bf16.mxu0 %v1705
        %1892 = vmatpush1.bf16.msra.mxu0 %v1704
        %1893 = vmatprep.mubr.bf16.mxu0 %v1307
        %1894 = vmatmul.mubr.bf16.gmra.mrb[0].mxu0 %v1298
        %v1895 = vpop.f32.mrb[0].mxu0
        %v1896 = vadd.f32 %v1837, %v1895
        %v1897 = vpop.f32.mrb[0].mxu0
        %v1898 = vadd.f32 %v1839, %v1897
        %v1899 = vpop.f32.mrb[0].mxu0
        %v1900 = vadd.f32 %v1841, %v1899
        %v1901 = vpop.f32.mrb[0].mxu0
        %v1902 = vadd.f32 %v1843, %v1901
        %1903 = vmatprep.mubr.bf16.mxu0 %v1309
        %1904 = vmatmul.mubr.bf16.gmra.mrb[0].mxu0 %v1300
        %v1905 = vpop.f32.mrb[0].mxu0
        %v1906 = vadd.f32 %v1847, %v1905
        %v1907 = vpop.f32.mrb[0].mxu0
        %v1908 = vadd.f32 %v1849, %v1907
        %v1909 = vpop.f32.mrb[0].mxu0
        %v1910 = vadd.f32 %v1851, %v1909
        %v1911 = vpop.f32.mrb[0].mxu0
        %v1912 = vadd.f32 %v1853, %v1911
        %1913 = vmatprep.mubr.bf16.mxu0 %v1308
        %1914 = vmatmul.mubr.bf16.gmra.mrb[0].mxu0 %v1299
        %v1915 = vpop.f32.mrb[0].mxu0
        %v1916 = vpop.f32.mrb[0].mxu0
        %v1917 = vpop.f32.mrb[0].mxu0
        %v1918 = vpop.f32.mrb[0].mxu0
        %1919 = vdwg.mxu0
        %1920 = vmatprep.subr.bf16.mxu0 %v1707
        %1921 = vmatpush1.bf16.msra.mxu0 %v1706
        %1922 = vmatprep.subr.bf16.mxu0 %v1709
        %1923 = vmatpush1.bf16.msra.mxu0 %v1708
        %1924 = vmatprep.subr.bf16.mxu0 %v1711
        %1925 = vmatpush1.bf16.msra.mxu0 %v1710
        %1926 = vmatprep.subr.bf16.mxu0 %v1713
        %1927 = vmatpush1.bf16.msra.mxu0 %v1712
        %1928 = vmatprep.subr.bf16.mxu0 %v1715
        %1929 = vmatpush1.bf16.msra.mxu0 %v1714
        %1930 = vmatprep.subr.bf16.mxu0 %v1717
        %1931 = vmatpush1.bf16.msra.mxu0 %v1716
        %1932 = vmatprep.subr.bf16.mxu0 %v1719
        %1933 = vmatpush1.bf16.msra.mxu0 %v1718
        %1934 = vmatprep.subr.bf16.mxu0 %v1721
        %1935 = vmatpush1.bf16.msra.mxu0 %v1720
        %1936 = vmatprep.subr.bf16.mxu0 0
        %1937 = vmatpush1.bf16.msra.mxu0 0
        %1938 = vmatprep.subr.bf16.mxu0 0
        %1939 = vmatpush1.bf16.msra.mxu0 0
        %1940 = vmatprep.subr.bf16.mxu0 0
        %1941 = vmatpush1.bf16.msra.mxu0 0
        %1942 = vmatprep.subr.bf16.mxu0 0
        %1943 = vmatpush1.bf16.msra.mxu0 0
        %1944 = vmatprep.subr.bf16.mxu0 0
        %1945 = vmatpush1.bf16.msra.mxu0 0
        %1946 = vmatprep.subr.bf16.mxu0 0
        %1947 = vmatpush1.bf16.msra.mxu0 0
        %1948 = vmatprep.subr.bf16.mxu0 0
        %1949 = vmatpush1.bf16.msra.mxu0 0
        %1950 = vmatprep.subr.bf16.mxu0 0
        %1951 = vmatpush1.bf16.msra.mxu0 0
        %1952 = vmatprep.mubr.bf16.mxu0 0
        %1953 = vmatmul.mubr.bf16.gmra.mrb[0].mxu0 %v1316
        %v1954 = vpop.f32.mrb[0].mxu0
        %v1955 = vadd.f32 %v1896, %v1954
        %v1956 = vpop.f32.mrb[0].mxu0
        %v1957 = vadd.f32 %v1898, %v1956
        %v1958 = vpop.f32.mrb[0].mxu0
        %v1959 = vadd.f32 %v1900, %v1958
        %v1960 = vpop.f32.mrb[0].mxu0
        %v1961 = vadd.f32 %v1902, %v1960
        %1962 = vmatprep.mubr.bf16.mxu0 0
        %1963 = vmatmul.mubr.bf16.gmra.mrb[0].mxu0 %v1318
        %v1964 = vpop.f32.mrb[0].mxu0
        %v1965 = vadd.f32 %v1906, %v1964
        %v1966 = vpop.f32.mrb[0].mxu0
        %v1967 = vadd.f32 %v1908, %v1966
        %v1968 = vpop.f32.mrb[0].mxu0
        %v1969 = vadd.f32 %v1910, %v1968
        %v1970 = vpop.f32.mrb[0].mxu0
        %v1971 = vadd.f32 %v1912, %v1970
        %1972 = vmatprep.mubr.bf16.mxu0 0
        %1973 = vmatmul.mubr.bf16.gmra.mrb[0].mxu0 %v1317
        %v1974 = vpop.f32.mrb[0].mxu0
        %v1975 = vpop.f32.mrb[0].mxu0
        %v1976 = vpop.f32.mrb[0].mxu0
        %v1977 = vpop.f32.mrb[0].mxu0
        %1978 = vdwg.mxu0
        %v1979 = vmax.f32 %v1955, %v1957
        %v1980 = vmax.f32 %v1959, %v1961
        %v1981 = vmax.f32 %v1965, %v1967
        %v1982 = vmax.f32 %v1969, %v1971
        %v1983 = vld [vmem:[%s4] sm:$0x1]
        %v1985 = vlaneseq
        %v1986 = vshrl.u32 %v1985, 7
        %v1987 = vsub.s32 0, %v1986
        %v1988 = vrot.slane %v1983, %v1987
        %v1990 = vadd.f32 %v1979, %v1988
        %v1991 = vadd.f32 %v1980, %v1988
        %v1992 = vadd.f32 %v1981, %v1988
        %v1993 = vadd.f32 %v1982, %v1988
        %v1994 = vmax.f32 %v1990, 0.0
        %v1995 = vmax.f32 %v1991, 0.0
        %v1996 = vmax.f32 %v1992, 0.0
        %v1997 = vmax.f32 %v1993, 0.0
        %vm2002 = vcmask 1045504
        %v2003 = vrot.slane %v1994, 2
        %v2004 = vrot.slane %v1995, 2
        %v2005 = vsel %vm2002, %v2003, %v2004
        %v2006 = vrot.slane %v1996, 2
        %v2007 = vsel %vm2002, %v2004, %v2006
        %v2008 = vrot.slane %v1997, 2
        %v2009 = vsel %vm2002, %v2006, %v2008
        %v2013 = vmax.f32 %v1994, %v2005
        %v2014 = vmax.f32 %v1995, %v2007
        %v2015 = vmax.f32 %v1996, %v2009
        %v2017 = vrot.slane %v2013, 4
        %v2020 = vrot.slane %v2014, 4
        %v2022 = vpack.c.bf16 %v2013, %v2013
        %v2023 = vpack.c.bf16 %v2017, %v2017
        %v2024 = vpack.c.bf16 %v2014, %v2014
        %v2025 = vpack.c.bf16 %v2020, %v2020
        %v2026 = vpack.c.bf16 %v2015, %v2015
        %vm2027 = vcmask 1040384
        %vm2028 = vsmask.f32 256
        %vm2029 = vmand %vm2027, %vm2028
        %v2030 = vsel %vm2029, %v2022, 0
        %v2031 = vsel %vm2029, %v2023, 0
        %v2032 = vsel %vm2029, %v2024, 0
        %v2033 = vsel %vm2029, %v2025, 0
        %v2034 = vsel %vm2029, %v2026, 0
        %v2035 = vld [vmem:[%s5] sm:$0xf]
        %v2036 = vld [vmem:[%s5 + $0x4] sm:$0xf]
        %v2037 = vld [vmem:[%s5 + $0x8] sm:$0xf]
        %v2038 = vld [vmem:[%s5 + $0xc] sm:$0xf]
        %v2039 = vld [vmem:[%s5 + $0x10] sm:$0xf]
        %v2040 = vld [vmem:[%s5 + $0x14] sm:$0xf]
        %v2041 = vld [vmem:[%s5 + $0x18] sm:$0xf]
        %v2042 = vld [vmem:[%s5 + $0x1c] sm:$0xf]
        %v2043 = vld [vmem:[%s5 + $0x20] sm:$0xf]
        %v2044 = vld [vmem:[%s5 + $0x24] sm:$0xf]
        %v2045 = vld [vmem:[%s5 + $0x28] sm:$0xf]
        %v2046 = vld [vmem:[%s5 + $0x2c] sm:$0xf]
        %v2047 = vld [vmem:[%s5 + $0x30] sm:$0xf]
        %v2048 = vld [vmem:[%s5 + $0x34] sm:$0xf]
        %v2049 = vld [vmem:[%s5 + $0x38] sm:$0xf]
        %v2050 = vld [vmem:[%s5 + $0x3c] sm:$0xf]
        %v2051 = vld [vmem:[%s5 + $0x40] sm:$0xf]
        %v2052 = vld [vmem:[%s5 + $0x44] sm:$0xf]
        %v2053 = vld [vmem:[%s5 + $0x48] sm:$0xf]
        %v2054 = vld [vmem:[%s5 + $0x4c] sm:$0xf]
        %v2055 = vld [vmem:[%s5 + $0x50] sm:$0xf]
        %v2056 = vld [vmem:[%s5 + $0x54] sm:$0xf]
        %v2057 = vld [vmem:[%s5 + $0x58] sm:$0xf]
        %v2058 = vld [vmem:[%s5 + $0x5c] sm:$0xf]
        %v2059 = vld [vmem:[%s5 + $0x60] sm:$0xf]
        %v2060 = vld [vmem:[%s5 + $0x64] sm:$0xf]
        %v2061 = vld [vmem:[%s5 + $0x68] sm:$0xf]
        %v2062 = vld [vmem:[%s5 + $0x6c] sm:$0xf]
        %v2063 = vld [vmem:[%s5 + $0x70] sm:$0xf]
        %v2064 = vld [vmem:[%s5 + $0x74] sm:$0xf]
        %v2065 = vld [vmem:[%s5 + $0x78] sm:$0xf]
        %v2066 = vld [vmem:[%s5 + $0x7c] sm:$0xf]
        %v2067 = vld [vmem:[%s5 + $0x80] sm:$0xf]
        %v2068 = vld [vmem:[%s5 + $0x84] sm:$0xf]
        %v2069 = vld [vmem:[%s5 + $0x88] sm:$0xf]
        %v2070 = vld [vmem:[%s5 + $0x8c] sm:$0xf]
        %v2071 = vld [vmem:[%s5 + $0x90] sm:$0xf]
        %v2072 = vld [vmem:[%s5 + $0x94] sm:$0xf]
        %v2073 = vld [vmem:[%s5 + $0x98] sm:$0xf]
        %v2074 = vld [vmem:[%s5 + $0x9c] sm:$0xf]
        %v2075 = vld [vmem:[%s5 + $0xa0] sm:$0xf]
        %v2076 = vld [vmem:[%s5 + $0xa4] sm:$0xf]
        %v2077 = vld [vmem:[%s5 + $0xa8] sm:$0xf]
        %v2078 = vld [vmem:[%s5 + $0xac] sm:$0xf]
        %v2079 = vld [vmem:[%s5 + $0xb0] sm:$0xf]
        %v2080 = vld [vmem:[%s5 + $0xb4] sm:$0xf]
        %v2081 = vld [vmem:[%s5 + $0xb8] sm:$0xf]
        %v2082 = vld [vmem:[%s5 + $0xbc] sm:$0xf]
        %v2083 = vld [vmem:[%s5 + $0xc0] sm:$0xf]
        %v2084 = vld [vmem:[%s5 + $0xc4] sm:$0xf]
        %v2085 = vld [vmem:[%s5 + $0xc8] sm:$0xf]
        %v2086 = vld [vmem:[%s5 + $0xcc] sm:$0xf]
        %v2087 = vld [vmem:[%s5 + $0xd0] sm:$0xf]
        %v2088 = vld [vmem:[%s5 + $0xd4] sm:$0xf]
        %v2089 = vld [vmem:[%s5 + $0xd8] sm:$0xf]
        %v2090 = vld [vmem:[%s5 + $0xdc] sm:$0xf]
        %v2091 = vld [vmem:[%s5 + $0xe0] sm:$0xf]
        %v2092 = vld [vmem:[%s5 + $0xe4] sm:$0xf]
        %v2093 = vld [vmem:[%s5 + $0xe8] sm:$0xf]
        %v2094 = vld [vmem:[%s5 + $0xec] sm:$0xf]
        %v2095 = vld [vmem:[%s5 + $0xf0] sm:$0xf]
        %v2096 = vld [vmem:[%s5 + $0xf4] sm:$0xf]
        %v2097 = vld [vmem:[%s5 + $0xf8] sm:$0xf]
        %v2098 = vld [vmem:[%s5 + $0xfc] sm:$0xf]
        %v2099 = vld [vmem:[%s5 + $0x100] sm:$0xf]
        %v2100 = vld [vmem:[%s5 + $0x104] sm:$0xf]
        %v2101 = vld [vmem:[%s5 + $0x108] sm:$0xf]
        %v2102 = vld [vmem:[%s5 + $0x10c] sm:$0xf]
        %v2103 = vld [vmem:[%s5 + $0x110] sm:$0xf]
        %v2104 = vld [vmem:[%s5 + $0x114] sm:$0xf]
        %v2105 = vld [vmem:[%s5 + $0x118] sm:$0xf]
        %v2106 = vld [vmem:[%s5 + $0x11c] sm:$0xf]
        %v2107 = vld [vmem:[%s5 + $0x120] sm:$0xf]
        %v2108 = vld [vmem:[%s5 + $0x124] sm:$0xf]
        %v2109 = vld [vmem:[%s5 + $0x128] sm:$0xf]
        %v2110 = vld [vmem:[%s5 + $0x12c] sm:$0xf]
        %v2111 = vld [vmem:[%s5 + $0x130] sm:$0xf]
        %v2112 = vld [vmem:[%s5 + $0x134] sm:$0xf]
        %v2113 = vld [vmem:[%s5 + $0x138] sm:$0xf]
        %v2114 = vld [vmem:[%s5 + $0x13c] sm:$0xf]
        %v2115 = vld [vmem:[%s6] sm:$0x1]
        %v2117 = vlaneseq
        %v2118 = vshrl.u32 %v2117, 7
        %v2119 = vsub.s32 0, %v2118
        %v2120 = vrot.slane %v2115, %v2119
        %v2202 = vunpack.c.l.b16 %v2035
        %v2203 = vunpack.c.l.b16 %v2036
        %v2204 = vunpack.c.l.b16 %v2037
        %v2205 = vunpack.c.l.b16 %v2038
        %v2206 = vunpack.c.l.b16 %v2039
        %v2207 = vunpack.c.l.b16 %v2040
        %v2208 = vunpack.c.l.b16 %v2041
        %v2209 = vunpack.c.l.b16 %v2042
        %v2210 = vunpack.c.l.b16 %v2043
        %v2211 = vunpack.c.l.b16 %v2044
        %v2212 = vunpack.c.l.b16 %v2045
        %v2213 = vunpack.c.l.b16 %v2046
        %v2214 = vunpack.c.l.b16 %v2047
        %v2215 = vunpack.c.l.b16 %v2048
        %v2216 = vunpack.c.l.b16 %v2049
        %v2217 = vunpack.c.l.b16 %v2050
        %v2218 = vunpack.c.l.b16 %v2051
        %v2219 = vunpack.c.l.b16 %v2052
        %v2220 = vunpack.c.l.b16 %v2053
        %v2221 = vunpack.c.l.b16 %v2054
        %v2222 = vunpack.c.l.b16 %v2055
        %v2223 = vunpack.c.l.b16 %v2056
        %v2224 = vunpack.c.l.b16 %v2057
        %v2225 = vunpack.c.l.b16 %v2058
        %v2226 = vunpack.c.l.b16 %v2059
        %v2227 = vunpack.c.l.b16 %v2060
        %v2228 = vunpack.c.l.b16 %v2061
        %v2229 = vunpack.c.l.b16 %v2062
        %v2230 = vunpack.c.l.b16 %v2063
        %v2231 = vunpack.c.l.b16 %v2064
        %v2232 = vunpack.c.l.b16 %v2065
        %v2233 = vunpack.c.l.b16 %v2066
        %v2234 = vunpack.c.l.b16 %v2067
        %v2235 = vunpack.c.l.b16 %v2068
        %v2236 = vunpack.c.l.b16 %v2069
        %v2237 = vunpack.c.l.b16 %v2070
        %v2238 = vunpack.c.l.b16 %v2071
        %v2239 = vunpack.c.l.b16 %v2072
        %v2240 = vunpack.c.l.b16 %v2073
        %v2241 = vunpack.c.l.b16 %v2074
        %v2242 = vunpack.c.l.b16 %v2075
        %v2243 = vunpack.c.l.b16 %v2076
        %v2244 = vunpack.c.l.b16 %v2077
        %v2245 = vunpack.c.l.b16 %v2078
        %v2246 = vunpack.c.l.b16 %v2079
        %v2247 = vunpack.c.l.b16 %v2080
        %v2248 = vunpack.c.l.b16 %v2081
        %v2249 = vunpack.c.l.b16 %v2082
        %v2250 = vunpack.c.l.b16 %v2083
        %v2251 = vunpack.c.l.b16 %v2084
        %v2252 = vunpack.c.l.b16 %v2085
        %v2253 = vunpack.c.l.b16 %v2086
        %v2254 = vunpack.c.l.b16 %v2087
        %v2255 = vunpack.c.l.b16 %v2088
        %v2256 = vunpack.c.l.b16 %v2089
        %v2257 = vunpack.c.l.b16 %v2090
        %v2258 = vunpack.c.l.b16 %v2091
        %v2259 = vunpack.c.l.b16 %v2092
        %v2260 = vunpack.c.l.b16 %v2093
        %v2261 = vunpack.c.l.b16 %v2094
        %v2262 = vunpack.c.l.b16 %v2095
        %v2263 = vunpack.c.l.b16 %v2096
        %v2264 = vunpack.c.l.b16 %v2097
        %v2265 = vunpack.c.l.b16 %v2098
        %v2266 = vunpack.c.l.b16 %v2099
        %v2267 = vunpack.c.l.b16 %v2100
        %v2268 = vunpack.c.l.b16 %v2101
        %v2269 = vunpack.c.l.b16 %v2102
        %v2270 = vunpack.c.l.b16 %v2103
        %v2271 = vunpack.c.l.b16 %v2104
        %v2272 = vunpack.c.l.b16 %v2105
        %v2273 = vunpack.c.l.b16 %v2106
        %v2274 = vunpack.c.l.b16 %v2107
        %v2275 = vunpack.c.l.b16 %v2108
        %v2276 = vunpack.c.l.b16 %v2109
        %v2277 = vunpack.c.l.b16 %v2110
        %v2278 = vunpack.c.l.b16 %v2111
        %v2279 = vunpack.c.l.b16 %v2112
        %v2280 = vunpack.c.l.b16 %v2113
        %v2281 = vunpack.c.l.b16 %v2114
        %v2282 = vpack.c.b16 %v2203, %v2202
        %v2283 = vpack.c.b16 %v2205, %v2204
        %v2284 = vpack.c.b16 %v2207, %v2206
        %v2285 = vpack.c.b16 %v2209, %v2208
        %v2286 = vpack.c.b16 %v2211, %v2210
        %v2287 = vpack.c.b16 %v2213, %v2212
        %v2288 = vpack.c.b16 %v2215, %v2214
        %v2289 = vpack.c.b16 %v2217, %v2216
        %v2290 = vpack.c.b16 %v2219, %v2218
        %v2291 = vpack.c.b16 %v2221, %v2220
        %v2292 = vpack.c.b16 %v2223, %v2222
        %v2293 = vpack.c.b16 %v2225, %v2224
        %v2294 = vpack.c.b16 %v2227, %v2226
        %v2295 = vpack.c.b16 %v2229, %v2228
        %v2296 = vpack.c.b16 %v2231, %v2230
        %v2297 = vpack.c.b16 %v2233, %v2232
        %v2298 = vpack.c.b16 %v2235, %v2234
        %v2299 = vpack.c.b16 %v2237, %v2236
        %v2300 = vpack.c.b16 %v2239, %v2238
        %v2301 = vpack.c.b16 %v2241, %v2240
        %v2302 = vpack.c.b16 %v2243, %v2242
        %v2303 = vpack.c.b16 %v2245, %v2244
        %v2304 = vpack.c.b16 %v2247, %v2246
        %v2305 = vpack.c.b16 %v2249, %v2248
        %v2306 = vpack.c.b16 %v2251, %v2250
        %v2307 = vpack.c.b16 %v2253, %v2252
        %v2308 = vpack.c.b16 %v2255, %v2254
        %v2309 = vpack.c.b16 %v2257, %v2256
        %v2310 = vpack.c.b16 %v2259, %v2258
        %v2311 = vpack.c.b16 %v2261, %v2260
        %v2312 = vpack.c.b16 %v2263, %v2262
        %v2313 = vpack.c.b16 %v2265, %v2264
        %v2314 = vpack.c.b16 %v2267, %v2266
        %v2315 = vpack.c.b16 %v2269, %v2268
        %v2316 = vpack.c.b16 %v2271, %v2270
        %v2317 = vpack.c.b16 %v2273, %v2272
        %v2318 = vpack.c.b16 %v2275, %v2274
        %v2319 = vpack.c.b16 %v2277, %v2276
        %v2320 = vpack.c.b16 %v2279, %v2278
        %v2321 = vpack.c.b16 %v2281, %v2280
        %2362 = vmatprep.subr.bf16.mxu0 0
        %2363 = vmatpush1.bf16.msra.mxu0 %v2282
        %2364 = vmatprep.subr.bf16.mxu0 0
        %2365 = vmatpush1.bf16.msra.mxu0 %v2283
        %2366 = vmatprep.subr.bf16.mxu0 0
        %2367 = vmatpush1.bf16.msra.mxu0 %v2284
        %2368 = vmatprep.subr.bf16.mxu0 0
        %2369 = vmatpush1.bf16.msra.mxu0 %v2285
        %2370 = vmatprep.subr.bf16.mxu0 0
        %2371 = vmatpush1.bf16.msra.mxu0 %v2286
        %2372 = vmatprep.subr.bf16.mxu0 0
        %2373 = vmatpush1.bf16.msra.mxu0 %v2287
        %2374 = vmatprep.subr.bf16.mxu0 0
        %2375 = vmatpush1.bf16.msra.mxu0 %v2288
        %2376 = vmatprep.subr.bf16.mxu0 0
        %2377 = vmatpush1.bf16.msra.mxu0 %v2289
        %2378 = vmatprep.subr.bf16.mxu0 0
        %2379 = vmatpush1.bf16.msra.mxu0 %v2290
        %2380 = vmatprep.subr.bf16.mxu0 0
        %2381 = vmatpush1.bf16.msra.mxu0 %v2291
        %2382 = vmatprep.subr.bf16.mxu0 0
        %2383 = vmatpush1.bf16.msra.mxu0 %v2292
        %2384 = vmatprep.subr.bf16.mxu0 0
        %2385 = vmatpush1.bf16.msra.mxu0 %v2293
        %2386 = vmatprep.subr.bf16.mxu0 0
        %2387 = vmatpush1.bf16.msra.mxu0 %v2294
        %2388 = vmatprep.subr.bf16.mxu0 0
        %2389 = vmatpush1.bf16.msra.mxu0 %v2295
        %2390 = vmatprep.subr.bf16.mxu0 0
        %2391 = vmatpush1.bf16.msra.mxu0 %v2296
        %2392 = vmatprep.subr.bf16.mxu0 0
        %2393 = vmatpush1.bf16.msra.mxu0 %v2297
        %2394 = vmatprep.mubr.bf16.mxu0 %v2031
        %2395 = vmatmul.mubr.bf16.gmra.mrb[0].mxu0 %v2030
        %v2396 = vpop.f32.mrb[0].mxu0
        %v2397 = vadd.f32 %v2120, %v2396
        %v2398 = vpop.f32.mrb[0].mxu0
        %v2399 = vpop.f32.mrb[0].mxu0
        %v2400 = vpop.f32.mrb[0].mxu0
        %2401 = vdwg.mxu0
        %2402 = vmatprep.subr.bf16.mxu0 0
        %2403 = vmatpush1.bf16.msra.mxu0 %v2298
        %2404 = vmatprep.subr.bf16.mxu0 0
        %2405 = vmatpush1.bf16.msra.mxu0 %v2299
        %2406 = vmatprep.subr.bf16.mxu0 0
        %2407 = vmatpush1.bf16.msra.mxu0 %v2300
        %2408 = vmatprep.subr.bf16.mxu0 0
        %2409 = vmatpush1.bf16.msra.mxu0 %v2301
        %2410 = vmatprep.subr.bf16.mxu0 0
        %2411 = vmatpush1.bf16.msra.mxu0 %v2302
        %2412 = vmatprep.subr.bf16.mxu0 0
        %2413 = vmatpush1.bf16.msra.mxu0 %v2303
        %2414 = vmatprep.subr.bf16.mxu0 0
        %2415 = vmatpush1.bf16.msra.mxu0 %v2304
        %2416 = vmatprep.subr.bf16.mxu0 0
        %2417 = vmatpush1.bf16.msra.mxu0 %v2305
        %2418 = vmatprep.subr.bf16.mxu0 0
        %2419 = vmatpush1.bf16.msra.mxu0 %v2306
        %2420 = vmatprep.subr.bf16.mxu0 0
        %2421 = vmatpush1.bf16.msra.mxu0 %v2307
        %2422 = vmatprep.subr.bf16.mxu0 0
        %2423 = vmatpush1.bf16.msra.mxu0 %v2308
        %2424 = vmatprep.subr.bf16.mxu0 0
        %2425 = vmatpush1.bf16.msra.mxu0 %v2309
        %2426 = vmatprep.subr.bf16.mxu0 0
        %2427 = vmatpush1.bf16.msra.mxu0 %v2310
        %2428 = vmatprep.subr.bf16.mxu0 0
        %2429 = vmatpush1.bf16.msra.mxu0 %v2311
        %2430 = vmatprep.subr.bf16.mxu0 0
        %2431 = vmatpush1.bf16.msra.mxu0 %v2312
        %2432 = vmatprep.subr.bf16.mxu0 0
        %2433 = vmatpush1.bf16.msra.mxu0 %v2313
        %2434 = vmatprep.mubr.bf16.mxu0 %v2033
        %2435 = vmatmul.mubr.bf16.gmra.mrb[0].mxu0 %v2032
        %v2436 = vpop.f32.mrb[0].mxu0
        %v2437 = vadd.f32 %v2397, %v2436
        %v2438 = vpop.f32.mrb[0].mxu0
        %v2439 = vpop.f32.mrb[0].mxu0
        %v2440 = vpop.f32.mrb[0].mxu0
        %2441 = vdwg.mxu0
        %2442 = vmatprep.subr.bf16.mxu0 0
        %2443 = vmatpush1.bf16.msra.mxu0 %v2314
        %2444 = vmatprep.subr.bf16.mxu0 0
        %2445 = vmatpush1.bf16.msra.mxu0 %v2315
        %2446 = vmatprep.subr.bf16.mxu0 0
        %2447 = vmatpush1.bf16.msra.mxu0 %v2316
        %2448 = vmatprep.subr.bf16.mxu0 0
        %2449 = vmatpush1.bf16.msra.mxu0 %v2317
        %2450 = vmatprep.subr.bf16.mxu0 0
        %2451 = vmatpush1.bf16.msra.mxu0 %v2318
        %2452 = vmatprep.subr.bf16.mxu0 0
        %2453 = vmatpush1.bf16.msra.mxu0 %v2319
        %2454 = vmatprep.subr.bf16.mxu0 0
        %2455 = vmatpush1.bf16.msra.mxu0 %v2320
        %2456 = vmatprep.subr.bf16.mxu0 0
        %2457 = vmatpush1.bf16.msra.mxu0 %v2321
        %2458 = vmatprep.subr.bf16.mxu0 0
        %2459 = vmatpush1.bf16.msra.mxu0 0
        %2460 = vmatprep.subr.bf16.mxu0 0
        %2461 = vmatpush1.bf16.msra.mxu0 0
        %2462 = vmatprep.subr.bf16.mxu0 0
        %2463 = vmatpush1.bf16.msra.mxu0 0
        %2464 = vmatprep.subr.bf16.mxu0 0
        %2465 = vmatpush1.bf16.msra.mxu0 0
        %2466 = vmatprep.subr.bf16.mxu0 0
        %2467 = vmatpush1.bf16.msra.mxu0 0
        %2468 = vmatprep.subr.bf16.mxu0 0
        %2469 = vmatpush1.bf16.msra.mxu0 0
        %2470 = vmatprep.subr.bf16.mxu0 0
        %2471 = vmatpush1.bf16.msra.mxu0 0
        %2472 = vmatprep.subr.bf16.mxu0 0
        %2473 = vmatpush1.bf16.msra.mxu0 0
        %2474 = vmatprep.mubr.bf16.mxu0 0
        %2475 = vmatmul.mubr.bf16.gmra.mrb[0].mxu0 %v2034
        %v2476 = vpop.f32.mrb[0].mxu0
        %v2477 = vadd.f32 %v2437, %v2476
        %v2478 = vpop.f32.mrb[0].mxu0
        %v2479 = vpop.f32.mrb[0].mxu0
        %v2480 = vpop.f32.mrb[0].mxu0
        %2481 = vdwg.mxu0
        %v2482 = vmax.f32 %v2477, 0.0
        %v2483 = vpack.c.bf16 %v2482, %v2482
        %v2484 = vld [vmem:[%s7] sm:$0xf]
        %v2485 = vld [vmem:[%s7 + $0x4] sm:$0xf]
        %v2486 = vld [vmem:[%s7 + $0x8] sm:$0xf]
        %v2487 = vld [vmem:[%s7 + $0xc] sm:$0xf]
        %v2488 = vld [vmem:[%s7 + $0x10] sm:$0xf]
        %v2489 = vld [vmem:[%s7 + $0x14] sm:$0xf]
        %v2490 = vld [vmem:[%s7 + $0x18] sm:$0xf]
        %v2491 = vld [vmem:[%s7 + $0x1c] sm:$0xf]
        %v2492 = vld [vmem:[%s7 + $0x20] sm:$0xf]
        %v2493 = vld [vmem:[%s7 + $0x24] sm:$0xf]
        %v2494 = vld [vmem:[%s7 + $0x28] sm:$0xf]
        %v2495 = vld [vmem:[%s7 + $0x2c] sm:$0xf]
        %v2496 = vld [vmem:[%s7 + $0x30] sm:$0xf]
        %v2497 = vld [vmem:[%s7 + $0x34] sm:$0xf]
        %v2498 = vld [vmem:[%s7 + $0x38] sm:$0xf]
        %v2499 = vld [vmem:[%s7 + $0x3c] sm:$0xf]
        %v2500 = vld [vmem:[%s8] sm:$0x1]
        %v2502 = vlaneseq
        %v2503 = vshrl.u32 %v2502, 7
        %v2504 = vsub.s32 0, %v2503
        %v2505 = vrot.slane %v2500, %v2504
        %v2523 = vunpack.c.l.b16 %v2484
        %v2524 = vunpack.c.l.b16 %v2485
        %v2525 = vunpack.c.l.b16 %v2486
        %v2526 = vunpack.c.l.b16 %v2487
        %v2527 = vunpack.c.l.b16 %v2488
        %v2528 = vunpack.c.l.b16 %v2489
        %v2529 = vunpack.c.l.b16 %v2490
        %v2530 = vunpack.c.l.b16 %v2491
        %v2531 = vunpack.c.l.b16 %v2492
        %v2532 = vunpack.c.l.b16 %v2493
        %v2533 = vunpack.c.l.b16 %v2494
        %v2534 = vunpack.c.l.b16 %v2495
        %v2535 = vunpack.c.l.b16 %v2496
        %v2536 = vunpack.c.l.b16 %v2497
        %v2537 = vunpack.c.l.b16 %v2498
        %v2538 = vunpack.c.l.b16 %v2499
        %v2539 = vpack.c.b16 %v2524, %v2523
        %v2540 = vpack.c.b16 %v2526, %v2525
        %v2541 = vpack.c.b16 %v2528, %v2527
        %v2542 = vpack.c.b16 %v2530, %v2529
        %v2543 = vpack.c.b16 %v2532, %v2531
        %v2544 = vpack.c.b16 %v2534, %v2533
        %v2545 = vpack.c.b16 %v2536, %v2535
        %v2546 = vpack.c.b16 %v2538, %v2537
        %2555 = vmatprep.subr.bf16.mxu0 0
        %2556 = vmatpush1.bf16.msra.mxu0 %v2539
        %2557 = vmatprep.subr.bf16.mxu0 0
        %2558 = vmatpush1.bf16.msra.mxu0 %v2540
        %2559 = vmatprep.subr.bf16.mxu0 0
        %2560 = vmatpush1.bf16.msra.mxu0 %v2541
        %2561 = vmatprep.subr.bf16.mxu0 0
        %2562 = vmatpush1.bf16.msra.mxu0 %v2542
        %2563 = vmatprep.subr.bf16.mxu0 0
        %2564 = vmatpush1.bf16.msra.mxu0 %v2543
        %2565 = vmatprep.subr.bf16.mxu0 0
        %2566 = vmatpush1.bf16.msra.mxu0 %v2544
        %2567 = vmatprep.subr.bf16.mxu0 0
        %2568 = vmatpush1.bf16.msra.mxu0 %v2545
        %2569 = vmatprep.subr.bf16.mxu0 0
        %2570 = vmatpush1.bf16.msra.mxu0 %v2546
        %2571 = vmatprep.subr.bf16.mxu0 0
        %2572 = vmatpush1.bf16.msra.mxu0 0
        %2573 = vmatprep.subr.bf16.mxu0 0
        %2574 = vmatpush1.bf16.msra.mxu0 0
        %2575 = vmatprep.subr.bf16.mxu0 0
        %2576 = vmatpush1.bf16.msra.mxu0 0
        %2577 = vmatprep.subr.bf16.mxu0 0
        %2578 = vmatpush1.bf16.msra.mxu0 0
        %2579 = vmatprep.subr.bf16.mxu0 0
        %2580 = vmatpush1.bf16.msra.mxu0 0
        %2581 = vmatprep.subr.bf16.mxu0 0
        %2582 = vmatpush1.bf16.msra.mxu0 0
        %2583 = vmatprep.subr.bf16.mxu0 0
        %2584 = vmatpush1.bf16.msra.mxu0 0
        %2585 = vmatprep.subr.bf16.mxu0 0
        %2586 = vmatpush1.bf16.msra.mxu0 0
        %2587 = vmatprep.mubr.bf16.mxu0 0
        %2588 = vmatmul.mubr.bf16.gmra.mrb[0].mxu0 %v2483
        %v2589 = vpop.f32.mrb[0].mxu0
        %v2590 = vadd.f32 %v2505, %v2589
        %v2591 = vpop.f32.mrb[0].mxu0
        %v2592 = vpop.f32.mrb[0].mxu0
        %v2593 = vpop.f32.mrb[0].mxu0
        %2594 = vdwg.mxu0
        %v2595 = vmax.f32 %v2590, 0.0
        %v2596 = vpack.c.bf16 %v2595, %v2595
        %v2597 = vld [vmem:[#allocation5] sm:$0xf]
        %v2598 = vld [vmem:[#allocation5 + $0x4] sm:$0xf]
        %v2599 = vld [vmem:[#allocation5 + $0x8] sm:$0xf]
        %v2600 = vld [vmem:[#allocation5 + $0xc] sm:$0xf]
        %v2601 = vld [vmem:[#allocation5 + $0x10] sm:$0xf]
        %v2602 = vld [vmem:[#allocation5 + $0x14] sm:$0xf]
        %v2603 = vld [vmem:[#allocation5 + $0x18] sm:$0xf]
        %v2604 = vld [vmem:[#allocation5 + $0x1c] sm:$0xf]
        %v2605 = vld [vmem:[#allocation5 + $0x20] sm:$0xf]
        %v2606 = vld [vmem:[#allocation5 + $0x24] sm:$0xf]
        %v2607 = vld [vmem:[#allocation5 + $0x28] sm:$0xf]
        %v2608 = vld [vmem:[#allocation5 + $0x2c] sm:$0xf]
        %v2609 = vld [vmem:[#allocation5 + $0x30] sm:$0xf]
        %v2610 = vld [vmem:[#allocation5 + $0x34] sm:$0xf]
        %v2611 = vld [vmem:[#allocation5 + $0x38] sm:$0xf]
        %v2612 = vld [vmem:[#allocation5 + $0x3c] sm:$0xf]
        %v2613 = vld [vmem:[%s10] sm:$0x1]
        %v2615 = vlaneseq
        %v2616 = vshrl.u32 %v2615, 7
        %v2617 = vsub.s32 0, %v2616
        %v2618 = vrot.slane %v2613, %v2617
        %v2636 = vunpack.c.l.b16 %v2597
        %v2637 = vunpack.c.l.b16 %v2598
        %v2638 = vunpack.c.l.b16 %v2599
        %v2639 = vunpack.c.l.b16 %v2600
        %v2640 = vunpack.c.l.b16 %v2601
        %v2641 = vunpack.c.l.b16 %v2602
        %v2642 = vunpack.c.l.b16 %v2603
        %v2643 = vunpack.c.l.b16 %v2604
        %v2644 = vunpack.c.l.b16 %v2605
        %v2645 = vunpack.c.l.b16 %v2606
        %v2646 = vunpack.c.l.b16 %v2607
        %v2647 = vunpack.c.l.b16 %v2608
        %v2648 = vunpack.c.l.b16 %v2609
        %v2649 = vunpack.c.l.b16 %v2610
        %v2650 = vunpack.c.l.b16 %v2611
        %v2651 = vunpack.c.l.b16 %v2612
        %v2652 = vpack.c.b16 %v2637, %v2636
        %v2653 = vpack.c.b16 %v2639, %v2638
        %v2654 = vpack.c.b16 %v2641, %v2640
        %v2655 = vpack.c.b16 %v2643, %v2642
        %v2656 = vpack.c.b16 %v2645, %v2644
        %v2657 = vpack.c.b16 %v2647, %v2646
        %v2658 = vpack.c.b16 %v2649, %v2648
        %v2659 = vpack.c.b16 %v2651, %v2650
        %2668 = vmatprep.subr.bf16.mxu0 0
        %2669 = vmatpush1.bf16.msra.mxu0 %v2652
        %2670 = vmatprep.subr.bf16.mxu0 0
        %2671 = vmatpush1.bf16.msra.mxu0 %v2653
        %2672 = vmatprep.subr.bf16.mxu0 0
        %2673 = vmatpush1.bf16.msra.mxu0 %v2654
        %2674 = vmatprep.subr.bf16.mxu0 0
        %2675 = vmatpush1.bf16.msra.mxu0 %v2655
        %2676 = vmatprep.subr.bf16.mxu0 0
        %2677 = vmatpush1.bf16.msra.mxu0 %v2656
        %2678 = vmatprep.subr.bf16.mxu0 0
        %2679 = vmatpush1.bf16.msra.mxu0 %v2657
        %2680 = vmatprep.subr.bf16.mxu0 0
        %2681 = vmatpush1.bf16.msra.mxu0 %v2658
        %2682 = vmatprep.subr.bf16.mxu0 0
        %2683 = vmatpush1.bf16.msra.mxu0 %v2659
        %2684 = vmatprep.subr.bf16.mxu0 0
        %2685 = vmatpush1.bf16.msra.mxu0 0
        %2686 = vmatprep.subr.bf16.mxu0 0
        %2687 = vmatpush1.bf16.msra.mxu0 0
        %2688 = vmatprep.subr.bf16.mxu0 0
        %2689 = vmatpush1.bf16.msra.mxu0 0
        %2690 = vmatprep.subr.bf16.mxu0 0
        %2691 = vmatpush1.bf16.msra.mxu0 0
        %2692 = vmatprep.subr.bf16.mxu0 0
        %2693 = vmatpush1.bf16.msra.mxu0 0
        %2694 = vmatprep.subr.bf16.mxu0 0
        %2695 = vmatpush1.bf16.msra.mxu0 0
        %2696 = vmatprep.subr.bf16.mxu0 0
        %2697 = vmatpush1.bf16.msra.mxu0 0
        %2698 = vmatprep.subr.bf16.mxu0 0
        %2699 = vmatpush1.bf16.msra.mxu0 0
        %2700 = vmatprep.mubr.bf16.mxu0 0
        %2701 = vmatmul.mubr.bf16.gmra.mrb[0].mxu0 %v2596
        %v2702 = vpop.f32.mrb[0].mxu0
        %v2703 = vadd.f32 %v2618, %v2702
        %v2704 = vpop.f32.mrb[0].mxu0
        %v2705 = vpop.f32.mrb[0].mxu0
        %v2706 = vpop.f32.mrb[0].mxu0
        %2707 = vdwg.mxu0
        %2708 = vst [vmem:[%s408] sm:$0x1] %v2703
        %s2709 = sand.u32 %s271, 1
        %s2710 = scalar_lea.sflag [#allocation4], %s2709
        %s2711 = sand.u32 %s271, 1
        %s2712 = scalar_lea.vmem [#allocation7], %s2711
        // Predicated region
        $region73: #{danknet_forward.1} parent=63 // pred_check
          %p2713 = pneg %p281
        $region74: #{danknet_forward.1} parent=63 // pred_check_branch
          %2715 = sbr.rel (%p2713) target = $region76
        $region75: #{danknet_forward.1} parent=63 // pred_region
          %s2717 = ssub.s32 16, 16
          %2718 = vsyncadd %s2710, %s2717
          %s2719 = smul.addr %s27, 16
          %s2720 = scalar_lea.hbm %s11, %s2719
          %s2722 = sshll.u32 %s2712, 4
          %s2723 = int_to_ptr.vmem [resolvable:$true] %s2722
          %2725 = dma.vmem_to_hbm [thread:$0]  %s2723, 16, %s2720, %s2710
        $region76: #{danknet_forward.1} parent=63 // pred_fallthru
          _
      $region64: #{danknet_forward.1} parent=5 // pred_fallthru
        _
      %p2726 = scmp.le.s32.totalorder 2, %s22
      // Predicated region
      $region77: #{danknet_forward.1} parent=5 // pred_check
        %p2727 = pneg %p2726
      $region78: #{danknet_forward.1} parent=5 // pred_check_branch
        %2729 = sbr.rel (%p2727) target = $region80
      $region79: #{danknet_forward.1} parent=5 // pred_region
        %s2730 = ssub.s32 %s22, 2
        // Predicated region
        $region81: #{danknet_forward.1} parent=79 // pred_check
          %p2731 = pneg %p287
        $region82: #{danknet_forward.1} parent=79 // pred_check_branch
          %2733 = sbr.rel (%p2731) target = $region84
        $region83: #{danknet_forward.1} parent=79 // pred_region
          %s2734 = sand.u32 %s272, 1
          %s2735 = scalar_lea.sflag [#allocation4], %s2734
          %s2736 = sand.u32 %s272, 1
          %s2737 = scalar_lea.vmem [#allocation7], %s2736
          %2738 = dma.done %s2735, 16
        $region84: #{danknet_forward.1} parent=79 // pred_fallthru
          _
      $region80: #{danknet_forward.1} parent=5 // pred_fallthru
        _
    $region6: #{danknet_forward.1} parent=1 // loop_footer
      %s26 = sadd.s32 1, %s22
    $region7: #{danknet_forward.1} parent=1 // loop_footer_branch
      %21 = sbr.rel target = $region3
    $region8: #{danknet_forward.1} parent=1 // loop_exit
      _
    %2739 = vsyncpa [#allocation3], 1
    %s2740 = scalar_lea.sflag [#allocation3], 1
    %2741 = vsyncpa %s2740, 1
    %2742 = vsyncpa [#allocation6], 1
    %2743 = vsyncpa [#allocation4], 1
    %s2744 = scalar_lea.sflag [#allocation4], 1
    %2745 = vsyncpa %s2744, 1

</llo_original>
